<compile_context>
chip_gen: v6e
topology: v6e:2x2x1
jax: 0.10.0
libtpu: 0.0.40
codegen_flags: <defaults>
</compile_context>

<pallas_src>
import math

import jax
import jax.numpy as jnp
from jax.experimental import pallas as pl
from jax.experimental.pallas import tpu as pltpu


# ----------------------------------------------------------------------------
# Pallas kernel: pipelined (projection of chunk s) + (recurrence of chunk s-1).
# ----------------------------------------------------------------------------
def bilstm_chunk_kernel(x_ref,      # (2, TC*B, D)  [0]=fwd chunk s, [1]=bwd (pre-reversed) chunk s
                        wih_ref,    # (2, D, 4H)    stacked W_ih^T (compute dtype)
                        whh_ref,    # (2, H, 4H)    stacked W_hh^T (f32)
                        b_ref,      # (2, 1, 4H)    stacked (b_ih + b_hh) (f32)
                        out_ref,    # (B, 2H)       cat([h_fwd_final, h_bwd_final], -1)
                        pg_ref,     # scratch (4, TC*B, 4H) f32 pre-gates; index = 2*dir + slot
                        h_ref,      # scratch (2, B, H) f32 hidden carry [fwd, bwd]
                        c_ref):     # scratch (2, B, H) f32 cell   carry [fwd, bwd]
    B = out_ref.shape[0]
    H = whh_ref.shape[1]
    rows = pg_ref.shape[1]
    TC = rows // B

    step = pl.program_id(0)
    nsteps = pl.num_programs(0)          # n_chunks + 1
    slot = step % 2

    # ---- init recurrent state (before any recurrence runs) ------------------
    @pl.when(step == 0)
    def _init():
        h_ref[...] = jnp.zeros_like(h_ref)
        c_ref[...] = jnp.zeros_like(c_ref)

    # ---- phase 1: input projection for chunk `step`, one step ahead ---------
    # Two plain 2-D MXU matmuls (bf16 in, f32 acc), written to ping-pong slot
    # `slot`.  They do not feed this step's recurrence, so the scheduler /
    # pipeline can hide them under the latency-bound phase 2.
    @pl.when(step < nsteps - 1)
    def _phase1():
        xp_f = jnp.dot(x_ref[0], wih_ref[0],
                       preferred_element_type=jnp.float32) + b_ref[0]   # (TC*B, 4H)
        xp_b = jnp.dot(x_ref[1], wih_ref[1],
                       preferred_element_type=jnp.float32) + b_ref[1]   # (TC*B, 4H)
        pg_ref[slot] = xp_f          # fwd pre-gates, local time ascending
        pg_ref[2 + slot] = xp_b      # bwd pre-gates, already time-reversed

    # ---- phase 2: recurrence over chunk `step - 1` (other ping-pong slot) ---
    @pl.when(step > 0)
    def _phase2():
        prev = (step + 1) % 2
        whh_f = whh_ref[0]           # (H, 4H), hoisted out of the loop
        whh_b = whh_ref[1]

        def cell(pre, h, c, whh):
            gates = pre + jnp.dot(h, whh, preferred_element_type=jnp.float32)
            i_f = jax.nn.sigmoid(gates[:, :2 * H])          # fused i|f sigmoid
            g = jnp.tanh(gates[:, 2 * H:3 * H])
            o = jax.nn.sigmoid(gates[:, 3 * H:])
            c_new = i_f[:, H:] * c + i_f[:, :H] * g
            return o * jnp.tanh(c_new), c_new

        def body(tau, carry):
            h_f, c_f, h_b, c_b = carry
            r = pl.multiple_of(tau * B, B)
            pf = pg_ref[prev, pl.ds(r, B), :]               # (B, 4H), contiguous
            pb = pg_ref[2 + prev, pl.ds(r, B), :]           # (B, 4H), contiguous
            h_f, c_f = cell(pf, h_f, c_f, whh_f)
            h_b, c_b = cell(pb, h_b, c_b, whh_b)
            return h_f, c_f, h_b, c_b

        h_f, c_f, h_b, c_b = jax.lax.fori_loop(
            0, TC, body, (h_ref[0], c_ref[0], h_ref[1], c_ref[1]),
            unroll=min(8, TC))

        # persist carry for the next chunk
        h_ref[0] = h_f
        c_ref[0] = c_f
        h_ref[1] = h_b
        c_ref[1] = c_b

        @pl.when(step == nsteps - 1)
        def _final():
            out_ref[...] = jnp.concatenate([h_f, h_b], axis=-1)   # (B, 2H)


# ----------------------------------------------------------------------------
# Wrapper: embedding gather (glue, time-major, both directions) + pallas_call.
# ----------------------------------------------------------------------------
def _default_t_chunk(T, B, D, H, x_bytes, vmem_budget_bytes):
    """Largest t_chunk dividing T whose chunk-dependent working set fits."""
    best = None
    for tc in range(1, T + 1):
        if T % tc:
            continue
        if tc != T and (tc * B) % 8 != 0:
            continue
        need = (2 * 2 * tc * B * D * x_bytes        # double-buffered x block (2 dirs)
                + 2 * 2 * tc * B * 4 * H * 4)       # ping-pong pre-gate scratch
        if need <= vmem_budget_bytes:
            best = tc
    return best if best is not None else T


def lstm_encoder_forward(token_ids, params, *, t_chunk=None,
                         compute_dtype=jnp.bfloat16,
                         vmem_budget_bytes=40 * 1024 * 1024):
    B, T = token_ids.shape
    D = params["embedding"].shape[1]
    H = params["whh"].shape[1]
    x_bytes = jnp.dtype(compute_dtype).itemsize

    if t_chunk is None:
        # Re-derive vmem_budget_bytes (~24 MiB) for v7x's 64 MiB VMEM.
        t_chunk = _default_t_chunk(T, B, D, H, x_bytes, vmem_budget_bytes)
    assert T % t_chunk == 0, "t_chunk must divide the sequence length"
    n_chunks = T // t_chunk
    rows = t_chunk * B
    assert n_chunks == 1 or rows % 8 == 0, "t_chunk * batch must be a multiple of 8"

    # Embedding gather straight into time-major layout for BOTH directions:
    #   x_both[0, t*B + b] = emb[ids[b, t]]        (forward order)
    #   x_both[1, t*B + b] = emb[ids[b, T-1-t]]    (already time-reversed)
    # so both streams read chunk s at grid step s and the kernel never reverses.
    ids_f = jnp.transpose(token_ids).reshape(-1)
    ids_b = jnp.transpose(token_ids[:, ::-1]).reshape(-1)
    x_both = jnp.take(params["embedding"], jnp.stack([ids_f, ids_b], 0),
                      axis=0).astype(compute_dtype)              # (2, T*B, D)

    wih = params["wih"].astype(compute_dtype)                    # (2, D, 4H)
    whh = params["whh"].astype(jnp.float32)                      # (2, H, 4H)
    bias = params["b"].astype(jnp.float32)                       # (2, 1, 4H)

    # Explicit VMEM limit from the working-set estimate (scoped defaults are
    # 16/32 MiB and too small at real chunk sizes).
    vmem_est = (2 * 2 * rows * D * x_bytes          # double-buffered x block
                + 2 * 2 * rows * 4 * H * 4          # ping-pong pre-gate scratch
                + 2 * D * 4 * H * x_bytes           # W_ih
                + 2 * H * 4 * H * 4 + 2 * 4 * H * 4 # W_hh + bias
                + 2 * 2 * B * H * 4 + B * 2 * H * 4)  # h/c carry + output
    vmem_limit = int(min(64 * 1024 * 1024, max(4 * 1024 * 1024, 2 * vmem_est)))

    grid_spec = pltpu.PrefetchScalarGridSpec(
        num_scalar_prefetch=0,
        # +1 grid step: projection runs one chunk ahead of the recurrence.
        grid=(n_chunks + 1,),
        in_specs=[
            # x for both directions, chunk s (clamped on the drain step so no
            # extra DMA is issued: same block index as the previous step).
            pl.BlockSpec((2, rows, D),
                         lambda s: (0, jnp.minimum(s, n_chunks - 1), 0)),
            # resident weights / biases (constant block index)
            pl.BlockSpec((2, D, 4 * H), lambda s: (0, 0, 0)),
            pl.BlockSpec((2, H, 4 * H), lambda s: (0, 0, 0)),
            pl.BlockSpec((2, 1, 4 * H), lambda s: (0, 0, 0)),
        ],
        out_specs=pl.BlockSpec((B, 2 * H), lambda s: (0, 0)),
        scratch_shapes=[
            pltpu.VMEM((4, rows, 4 * H), jnp.float32),  # pre-gates: [2*dir + slot]
            pltpu.VMEM((2, B, H), jnp.float32),         # hidden carry [fwd, bwd]
            pltpu.VMEM((2, B, H), jnp.float32),         # cell   carry [fwd, bwd]
        ],
    )

    return pl.pallas_call(
        bilstm_chunk_kernel,
        out_shape=jax.ShapeDtypeStruct((B, 2 * H), jnp.float32),
        grid_spec=grid_spec,
        compiler_params=pltpu.CompilerParams(
            dimension_semantics=("arbitrary",),   # sequential: carried state
            vmem_limit_bytes=vmem_limit),
    )(x_both, wih, whh, bias)


# ----------------------------------------------------------------------------
# Pure-JAX reference (mirrors PyTorch nn.Embedding + bidirectional nn.LSTM).
# ----------------------------------------------------------------------------
def lstm_encoder_reference(token_ids, params, compute_dtype=jnp.float32):
    emb = jnp.take(params["embedding"], token_ids, axis=0)        # (B, T, D)
    x = emb.astype(compute_dtype).astype(jnp.float32)
    wih = params["wih"].astype(compute_dtype).astype(jnp.float32)
    whh = params["whh"]
    bias = params["b"]
    B, T, _ = x.shape
    H = whh.shape[1]
    hi = jax.lax.Precision.HIGHEST

    def cell(x_t, h, c, wih_d, whh_d, b_d):
        gates = (jnp.dot(x_t, wih_d, precision=hi)
                 + jnp.dot(h, whh_d, precision=hi) + b_d)
        i = jax.nn.sigmoid(gates[:, :H])
        f = jax.nn.sigmoid(gates[:, H:2 * H])
        g = jnp.tanh(gates[:, 2 * H:3 * H])
        o = jax.nn.sigmoid(gates[:, 3 * H:])
        c = f * c + i * g
        return o * jnp.tanh(c), c

    h_f = c_f = h_b = c_b = jnp.zeros((B, H), jnp.float32)
    for t in range(T):
        h_f, c_f = cell(x[:, t], h_f, c_f, wih[0], whh[0], bias[0])
        h_b, c_b = cell(x[:, T - 1 - t], h_b, c_b, wih[1], whh[1], bias[1])
    return jnp.concatenate([h_f, h_b], axis=-1)


# ----------------------------------------------------------------------------
# Deterministic parameter init (PyTorch-style shapes & init ranges).
# ----------------------------------------------------------------------------
def init_params(key, vocab_size, embedding_dim, input_size, hidden_size):
    assert input_size == embedding_dim, "LSTM input_size must equal embedding_dim"
    keys = jax.random.split(key, 9)
    H, D = hidden_size, input_size
    bound = 1.0 / math.sqrt(H)

    def u(k, shape):
        return jax.random.uniform(k, shape, jnp.float32, -bound, bound)

    # PyTorch stores weight_ih (4H, D) / weight_hh (4H, H); kernel uses transposes.
    w_ih = jnp.stack([u(keys[1], (4 * H, D)), u(keys[5], (4 * H, D))])   # (2,4H,D)
    w_hh = jnp.stack([u(keys[2], (4 * H, H)), u(keys[6], (4 * H, H))])   # (2,4H,H)
    b_ih = jnp.stack([u(keys[3], (4 * H,)), u(keys[7], (4 * H,))])
    b_hh = jnp.stack([u(keys[4], (4 * H,)), u(keys[8], (4 * H,))])

    return {
        "embedding": jax.random.normal(keys[0], (vocab_size, embedding_dim),
                                       jnp.float32),
        "wih": jnp.transpose(w_ih, (0, 2, 1)),      # (2, D, 4H)
        "whh": jnp.transpose(w_hh, (0, 2, 1)),      # (2, H, 4H)
        "b": (b_ih + b_hh).reshape(2, 1, 4 * H),    # (2, 1, 4H)
    }


if __name__ == "__main__":
    VOCAB = 50
    EMBED = 32        # embedding_dim == input_size
    HIDDEN = 32
    BATCH = 2
    SEQ = 8

    key = jax.random.PRNGKey(0)
    k_params, k_tokens = jax.random.split(key)

    params = init_params(k_params, VOCAB, EMBED, EMBED, HIDDEN)
    token_ids = jax.random.randint(k_tokens, (BATCH, SEQ), 0, VOCAB,
                                   dtype=jnp.int32)   # (batch, seq)

    # t_chunk=4 -> 2 chunks + 1 pipeline drain step: exercises the ping-pong
    # pre-gate buffer, the phase shift, and the carried VMEM state.
    out_bf16 = jax.block_until_ready(
        lstm_encoder_forward(token_ids, params, t_chunk=4))
    out_f32 = jax.block_until_ready(
        lstm_encoder_forward(token_ids, params, t_chunk=4,
                             compute_dtype=jnp.float32))

    ref_f32 = lstm_encoder_reference(token_ids, params)
    ref_bf16 = lstm_encoder_reference(token_ids, params,
                                      compute_dtype=jnp.bfloat16)

    assert out_bf16.shape == (BATCH, 2 * HIDDEN), out_bf16.shape
    # f32 compute path: tight check of the pipeline / recurrence logic.
    assert jnp.allclose(out_f32, ref_f32, rtol=1e-3, atol=1e-3), (
        float(jnp.max(jnp.abs(out_f32 - ref_f32))))
    # bf16 path: tight vs dtype-matched reference, loose vs full-f32 reference.
    assert jnp.allclose(out_bf16, ref_bf16, rtol=3e-3, atol=3e-3), (
        float(jnp.max(jnp.abs(out_bf16 - ref_bf16))))
    assert jnp.allclose(out_bf16, ref_f32, rtol=5e-2, atol=5e-2), (
        float(jnp.max(jnp.abs(out_bf16 - ref_f32))))

    print("KERNEL_OK")
</pallas_src>

<mosaic_0001>
module attributes {stable_mosaic.version = 11 : i64} {
  func.func @bilstm_chunk_kernel(%arg0: i32, %arg1: memref<2x8x32xbf16, #tpu.memory_space<vmem>>, %arg2: memref<2x32x128xbf16, #tpu.memory_space<vmem>>, %arg3: memref<2x32x128xf32, #tpu.memory_space<vmem>>, %arg4: memref<2x1x128xf32, #tpu.memory_space<vmem>>, %arg5: memref<2x64xf32, #tpu.memory_space<vmem>>, %arg6: memref<4x8x128xf32, #tpu.memory_space<vmem>>, %arg7: memref<2x2x32xf32, #tpu.memory_space<vmem>>, %arg8: memref<2x2x32xf32, #tpu.memory_space<vmem>>) attributes {dimension_semantics = [#tpu.dimension_semantics<arbitrary>], iteration_bounds = array<i64: 3>, scalar_prefetch = 0 : i64, scratch_operands = 3 : i64, tpu.core_type = #tpu.core_type<tc>, window_params = [{transform_indices = @transform_0, window_bounds = array<i64: 2, 8, 32>}, {pipeline_mode = #tpu.pipeline_mode<synchronous>, transform_indices = @transform_1, window_bounds = array<i64: 2, 32, 128>}, {pipeline_mode = #tpu.pipeline_mode<synchronous>, transform_indices = @transform_2, window_bounds = array<i64: 2, 32, 128>}, {pipeline_mode = #tpu.pipeline_mode<synchronous>, transform_indices = @transform_3, window_bounds = array<i64: 2, 1, 128>}, {pipeline_mode = #tpu.pipeline_mode<synchronous>, transform_indices = @transform_4, window_bounds = array<i64: 2, 64>}]} {
    %c2_i32 = arith.constant 2 : i32
    %c0_i32 = arith.constant 0 : i32
    %0 = arith.cmpi eq, %c2_i32, %c0_i32 : i32
    %c1_i32 = arith.constant 1 : i32
    %1 = arith.select %0, %c1_i32, %c2_i32 : i32
    %2 = arith.remsi %arg0, %1 : i32
    %c0_i32_0 = arith.constant 0 : i32
    %3 = arith.cmpi ne, %2, %c0_i32_0 : i32
    %c0_i32_1 = arith.constant 0 : i32
    %4 = arith.cmpi slt, %2, %c0_i32_1 : i32
    %c0_i32_2 = arith.constant 0 : i32
    %5 = arith.cmpi slt, %1, %c0_i32_2 : i32
    %6 = arith.xori %4, %5 : i1
    %7 = arith.andi %6, %3 : i1
    %8 = arith.addi %2, %1 : i32
    %9 = arith.select %7, %8, %2 : i32
    %c0_i32_3 = arith.constant 0 : i32
    %10 = arith.cmpi eq, %arg0, %c0_i32_3 : i32
    %11 = arith.extui %10 : i1 to i32
    %c0_i32_4 = arith.constant 0 : i32
    %12 = arith.cmpi ne, %11, %c0_i32_4 : i32
    scf.if %12 {
      %cst = arith.constant 0.000000e+00 : f32
      %19 = vector.broadcast %cst : f32 to vector<2x2x32xf32>
      %c0 = arith.constant 0 : index
      %c0_9 = arith.constant 0 : index
      %c0_10 = arith.constant 0 : index
      %20 = vector.load %arg7[%c0, %c0_9, %c0_10] : memref<2x2x32xf32, #tpu.memory_space<vmem>>, vector<2x2x32xf32>
      tpu.vector_store %arg7[%c0, %c0_9, %c0_10], %19 {strides = array<i32>} : memref<2x2x32xf32, #tpu.memory_space<vmem>>, vector<2x2x32xf32>,
      %cst_11 = arith.constant 0.000000e+00 : f32
      %21 = vector.broadcast %cst_11 : f32 to vector<2x2x32xf32>
      %c0_12 = arith.constant 0 : index
      %c0_13 = arith.constant 0 : index
      %c0_14 = arith.constant 0 : index
      %22 = vector.load %arg8[%c0_12, %c0_13, %c0_14] : memref<2x2x32xf32, #tpu.memory_space<vmem>>, vector<2x2x32xf32>
      tpu.vector_store %arg8[%c0_12, %c0_13, %c0_14], %21 {strides = array<i32>} : memref<2x2x32xf32, #tpu.memory_space<vmem>>, vector<2x2x32xf32>,
    } else {
    }
    %c2_i32_5 = arith.constant 2 : i32
    %13 = arith.cmpi slt, %arg0, %c2_i32_5 : i32
    %14 = arith.extui %13 : i1 to i32
    %c0_i32_6 = arith.constant 0 : i32
    %15 = arith.cmpi ne, %14, %c0_i32_6 : i32
    scf.if %15 {
      %c0 = arith.constant 0 : index
      %c0_9 = arith.constant 0 : index
      %c0_10 = arith.constant 0 : index
      %19 = vector.load %arg1[%c0, %c0_9, %c0_10] : memref<2x8x32xbf16, #tpu.memory_space<vmem>>, vector<1x8x32xbf16>
      %20 = vector.shape_cast %19 : vector<1x8x32xbf16> to vector<8x32xbf16>
      %c0_11 = arith.constant 0 : index
      %c0_12 = arith.constant 0 : index
      %c0_13 = arith.constant 0 : index
      %21 = vector.load %arg2[%c0_11, %c0_12, %c0_13] : memref<2x32x128xbf16, #tpu.memory_space<vmem>>, vector<1x32x128xbf16>
      %22 = vector.shape_cast %21 : vector<1x32x128xbf16> to vector<32x128xbf16>
      %cst = arith.constant dense<0.000000e+00> : vector<8x128xf32>
      %23 = tpu.matmul %20, %22, %cst {dimension_numbers = #tpu.dot_dimension_numbers<[1], [0], [0], [1], [0, 0, 1, 1], [], []>} : vector<8x32xbf16>, vector<32x128xbf16>, vector<8x128xf32> -> vector<8x128xf32>
      %c0_14 = arith.constant 0 : index
      %c0_15 = arith.constant 0 : index
      %c0_16 = arith.constant 0 : index
      %24 = vector.load %arg4[%c0_14, %c0_15, %c0_16] : memref<2x1x128xf32, #tpu.memory_space<vmem>>, vector<1x1x128xf32>
      %25 = vector.shape_cast %24 : vector<1x1x128xf32> to vector<1x128xf32>
      %26 = vector.broadcast %25 : vector<1x128xf32> to vector<8x128xf32>
      %27 = arith.addf %23, %26 : vector<8x128xf32>
      %c1 = arith.constant 1 : index
      %c0_17 = arith.constant 0 : index
      %c0_18 = arith.constant 0 : index
      %28 = vector.load %arg1[%c1, %c0_17, %c0_18] : memref<2x8x32xbf16, #tpu.memory_space<vmem>>, vector<1x8x32xbf16>
      %29 = vector.shape_cast %28 : vector<1x8x32xbf16> to vector<8x32xbf16>
      %c1_19 = arith.constant 1 : index
      %c0_20 = arith.constant 0 : index
      %c0_21 = arith.constant 0 : index
      %30 = vector.load %arg2[%c1_19, %c0_20, %c0_21] : memref<2x32x128xbf16, #tpu.memory_space<vmem>>, vector<1x32x128xbf16>
      %31 = vector.shape_cast %30 : vector<1x32x128xbf16> to vector<32x128xbf16>
      %cst_22 = arith.constant dense<0.000000e+00> : vector<8x128xf32>
      %32 = tpu.matmul %29, %31, %cst_22 {dimension_numbers = #tpu.dot_dimension_numbers<[1], [0], [0], [1], [0, 0, 1, 1], [], []>} : vector<8x32xbf16>, vector<32x128xbf16>, vector<8x128xf32> -> vector<8x128xf32>
      %c1_23 = arith.constant 1 : index
      %c0_24 = arith.constant 0 : index
      %c0_25 = arith.constant 0 : index
      %33 = vector.load %arg4[%c1_23, %c0_24, %c0_25] : memref<2x1x128xf32, #tpu.memory_space<vmem>>, vector<1x1x128xf32>
      %34 = vector.shape_cast %33 : vector<1x1x128xf32> to vector<1x128xf32>
      %35 = vector.broadcast %34 : vector<1x128xf32> to vector<8x128xf32>
      %36 = arith.addf %32, %35 : vector<8x128xf32>
      %37 = arith.index_cast %9 : i32 to index
      %c0_26 = arith.constant 0 : index
      %c0_27 = arith.constant 0 : index
      %38 = vector.load %arg6[%37, %c0_26, %c0_27] : memref<4x8x128xf32, #tpu.memory_space<vmem>>, vector<1x8x128xf32>
      %39 = vector.shape_cast %38 : vector<1x8x128xf32> to vector<8x128xf32>
      %40 = vector.shape_cast %27 : vector<8x128xf32> to vector<1x8x128xf32>
      tpu.vector_store %arg6[%37, %c0_26, %c0_27], %40 {strides = array<i32>} : memref<4x8x128xf32, #tpu.memory_space<vmem>>, vector<1x8x128xf32>,
      %c2_i32_28 = arith.constant 2 : i32
      %41 = arith.addi %c2_i32_28, %9 : i32
      %42 = arith.index_cast %41 : i32 to index
      %c0_29 = arith.constant 0 : index
      %c0_30 = arith.constant 0 : index
      %43 = vector.load %arg6[%42, %c0_29, %c0_30] : memref<4x8x128xf32, #tpu.memory_space<vmem>>, vector<1x8x128xf32>
      %44 = vector.shape_cast %43 : vector<1x8x128xf32> to vector<8x128xf32>
      %45 = vector.shape_cast %36 : vector<8x128xf32> to vector<1x8x128xf32>
      tpu.vector_store %arg6[%42, %c0_29, %c0_30], %45 {strides = array<i32>} : memref<4x8x128xf32, #tpu.memory_space<vmem>>, vector<1x8x128xf32>,
    } else {
    }
    %c0_i32_7 = arith.constant 0 : i32
    %16 = arith.cmpi sgt, %arg0, %c0_i32_7 : i32
    %17 = arith.extui %16 : i1 to i32
    %c0_i32_8 = arith.constant 0 : i32
    %18 = arith.cmpi ne, %17, %c0_i32_8 : i32
    scf.if %18 {
      %c1_i32_9 = arith.constant 1 : i32
      %19 = arith.addi %arg0, %c1_i32_9 : i32
      %c2_i32_10 = arith.constant 2 : i32
      %c0_i32_11 = arith.constant 0 : i32
      %20 = arith.cmpi eq, %c2_i32_10, %c0_i32_11 : i32
      %c1_i32_12 = arith.constant 1 : i32
      %21 = arith.select %20, %c1_i32_12, %c2_i32_10 : i32
      %22 = arith.remsi %19, %21 : i32
      %c0_i32_13 = arith.constant 0 : i32
      %23 = arith.cmpi ne, %22, %c0_i32_13 : i32
      %c0_i32_14 = arith.constant 0 : i32
      %24 = arith.cmpi slt, %22, %c0_i32_14 : i32
      %c0_i32_15 = arith.constant 0 : i32
      %25 = arith.cmpi slt, %21, %c0_i32_15 : i32
      %26 = arith.xori %24, %25 : i1
      %27 = arith.andi %26, %23 : i1
      %28 = arith.addi %22, %21 : i32
      %29 = arith.select %27, %28, %22 : i32
      %c0 = arith.constant 0 : index
      %c0_16 = arith.constant 0 : index
      %c0_17 = arith.constant 0 : index
      %30 = vector.load %arg3[%c0, %c0_16, %c0_17] : memref<2x32x128xf32, #tpu.memory_space<vmem>>, vector<1x32x128xf32>
      %31 = vector.shape_cast %30 : vector<1x32x128xf32> to vector<32x128xf32>
      %c1 = arith.constant 1 : index
      %c0_18 = arith.constant 0 : index
      %c0_19 = arith.constant 0 : index
      %32 = vector.load %arg3[%c1, %c0_18, %c0_19] : memref<2x32x128xf32, #tpu.memory_space<vmem>>, vector<1x32x128xf32>
      %33 = vector.shape_cast %32 : vector<1x32x128xf32> to vector<32x128xf32>
      %c0_20 = arith.constant 0 : index
      %c0_21 = arith.constant 0 : index
      %c0_22 = arith.constant 0 : index
      %34 = vector.load %arg7[%c0_20, %c0_21, %c0_22] : memref<2x2x32xf32, #tpu.memory_space<vmem>>, vector<1x2x32xf32>
      %35 = vector.shape_cast %34 : vector<1x2x32xf32> to vector<2x32xf32>
      %c0_23 = arith.constant 0 : index
      %c0_24 = arith.constant 0 : index
      %c0_25 = arith.constant 0 : index
      %36 = vector.load %arg8[%c0_23, %c0_24, %c0_25] : memref<2x2x32xf32, #tpu.memory_space<vmem>>, vector<1x2x32xf32>
      %37 = vector.shape_cast %36 : vector<1x2x32xf32> to vector<2x32xf32>
      %c1_26 = arith.constant 1 : index
      %c0_27 = arith.constant 0 : index
      %c0_28 = arith.constant 0 : index
      %38 = vector.load %arg7[%c1_26, %c0_27, %c0_28] : memref<2x2x32xf32, #tpu.memory_space<vmem>>, vector<1x2x32xf32>
      %39 = vector.shape_cast %38 : vector<1x2x32xf32> to vector<2x32xf32>
      %c1_29 = arith.constant 1 : index
      %c0_30 = arith.constant 0 : index
      %c0_31 = arith.constant 0 : index
      %40 = vector.load %arg8[%c1_29, %c0_30, %c0_31] : memref<2x2x32xf32, #tpu.memory_space<vmem>>, vector<1x2x32xf32>
      %41 = vector.shape_cast %40 : vector<1x2x32xf32> to vector<2x32xf32>
      %c0_i32_32 = arith.constant 0 : i32
      %c2_i32_33 = arith.constant 2 : i32
      %42 = arith.muli %c0_i32_32, %c2_i32_33 : i32
      %43 = tpu.assume_multiple %42, 2 : i32
      %44 = arith.index_cast %29 : i32 to index
      %45 = arith.index_cast %43 : i32 to index
      %c0_34 = arith.constant 0 : index
      %46 = vector.load %arg6[%44, %45, %c0_34] : memref<4x8x128xf32, #tpu.memory_space<vmem>>, vector<1x2x128xf32>
      %47 = vector.shape_cast %46 : vector<1x2x128xf32> to vector<2x128xf32>
      %c2_i32_35 = arith.constant 2 : i32
      %48 = arith.addi %c2_i32_35, %29 : i32
      %49 = arith.index_cast %48 : i32 to index
      %50 = arith.index_cast %43 : i32 to index
      %c0_36 = arith.constant 0 : index
      %51 = vector.load %arg6[%49, %50, %c0_36] : memref<4x8x128xf32, #tpu.memory_space<vmem>>, vector<1x2x128xf32>
      %52 = vector.shape_cast %51 : vector<1x2x128xf32> to vector<2x128xf32>
      %cst = arith.constant dense<0.000000e+00> : vector<2x128xf32>
      %53 = tpu.matmul %35, %31, %cst {dimension_numbers = #tpu.dot_dimension_numbers<[1], [0], [0], [1], [0, 0, 1, 1], [], []>} : vector<2x32xf32>, vector<32x128xf32>, vector<2x128xf32> -> vector<2x128xf32>
      %54 = arith.addf %47, %53 : vector<2x128xf32>
      %55 = vector.extract_strided_slice %54 {offsets = [0, 0], sizes = [2, 64], strides = [1, 1]} : vector<2x128xf32> to vector<2x64xf32>
      %56 = arith.negf %55 : vector<2x64xf32>
      %57 = math.exp %56 : vector<2x64xf32>
      %cst_37 = arith.constant 1.000000e+00 : f32
      %58 = vector.broadcast %cst_37 : f32 to vector<2x64xf32>
      %59 = arith.addf %58, %57 : vector<2x64xf32>
      %60 = arith.divf %58, %59 : vector<2x64xf32>
      %61 = vector.extract_strided_slice %54 {offsets = [0, 64], sizes = [2, 32], strides = [1, 1]} : vector<2x128xf32> to vector<2x32xf32>
      %62 = math.tanh %61 : vector<2x32xf32>
      %63 = vector.extract_strided_slice %54 {offsets = [0, 96], sizes = [2, 32], strides = [1, 1]} : vector<2x128xf32> to vector<2x32xf32>
      %64 = arith.negf %63 : vector<2x32xf32>
      %65 = math.exp %64 : vector<2x32xf32>
      %cst_38 = arith.constant 1.000000e+00 : f32
      %66 = vector.broadcast %cst_38 : f32 to vector<2x32xf32>
      %67 = arith.addf %66, %65 : vector<2x32xf32>
      %68 = arith.divf %66, %67 : vector<2x32xf32>
      %69 = vector.extract_strided_slice %60 {offsets = [0, 32], sizes = [2, 32], strides = [1, 1]} : vector<2x64xf32> to vector<2x32xf32>
      %70 = arith.mulf %69, %37 : vector<2x32xf32>
      %71 = vector.extract_strided_slice %60 {offsets = [0, 0], sizes = [2, 32], strides = [1, 1]} : vector<2x64xf32> to vector<2x32xf32>
      %72 = arith.mulf %71, %62 : vector<2x32xf32>
      %73 = arith.addf %70, %72 : vector<2x32xf32>
      %74 = math.tanh %73 : vector<2x32xf32>
      %75 = arith.mulf %68, %74 : vector<2x32xf32>
      %cst_39 = arith.constant dense<0.000000e+00> : vector<2x128xf32>
      %76 = tpu.matmul %39, %33, %cst_39 {dimension_numbers = #tpu.dot_dimension_numbers<[1], [0], [0], [1], [0, 0, 1, 1], [], []>} : vector<2x32xf32>, vector<32x128xf32>, vector<2x128xf32> -> vector<2x128xf32>
      %77 = arith.addf %52, %76 : vector<2x128xf32>
      %78 = vector.extract_strided_slice %77 {offsets = [0, 0], sizes = [2, 64], strides = [1, 1]} : vector<2x128xf32> to vector<2x64xf32>
      %79 = arith.negf %78 : vector<2x64xf32>
      %80 = math.exp %79 : vector<2x64xf32>
      %cst_40 = arith.constant 1.000000e+00 : f32
      %81 = vector.broadcast %cst_40 : f32 to vector<2x64xf32>
      %82 = arith.addf %81, %80 : vector<2x64xf32>
      %83 = arith.divf %81, %82 : vector<2x64xf32>
      %84 = vector.extract_strided_slice %77 {offsets = [0, 64], sizes = [2, 32], strides = [1, 1]} : vector<2x128xf32> to vector<2x32xf32>
      %85 = math.tanh %84 : vector<2x32xf32>
      %86 = vector.extract_strided_slice %77 {offsets = [0, 96], sizes = [2, 32], strides = [1, 1]} : vector<2x128xf32> to vector<2x32xf32>
      %87 = arith.negf %86 : vector<2x32xf32>
      %88 = math.exp %87 : vector<2x32xf32>
      %cst_41 = arith.constant 1.000000e+00 : f32
      %89 = vector.broadcast %cst_41 : f32 to vector<2x32xf32>
      %90 = arith.addf %89, %88 : vector<2x32xf32>
      %91 = arith.divf %89, %90 : vector<2x32xf32>
      %92 = vector.extract_strided_slice %83 {offsets = [0, 32], sizes = [2, 32], strides = [1, 1]} : vector<2x64xf32> to vector<2x32xf32>
      %93 = arith.mulf %92, %41 : vector<2x32xf32>
      %94 = vector.extract_strided_slice %83 {offsets = [0, 0], sizes = [2, 32], strides = [1, 1]} : vector<2x64xf32> to vector<2x32xf32>
      %95 = arith.mulf %94, %85 : vector<2x32xf32>
      %96 = arith.addf %93, %95 : vector<2x32xf32>
      %97 = math.tanh %96 : vector<2x32xf32>
      %98 = arith.mulf %91, %97 : vector<2x32xf32>
      %c1_i32_42 = arith.constant 1 : i32
      %c2_i32_43 = arith.constant 2 : i32
      %99 = arith.muli %c1_i32_42, %c2_i32_43 : i32
      %100 = tpu.assume_multiple %99, 2 : i32
      %101 = arith.index_cast %29 : i32 to index
      %102 = arith.index_cast %100 : i32 to index
      %c0_44 = arith.constant 0 : index
      %103 = vector.load %arg6[%101, %102, %c0_44] : memref<4x8x128xf32, #tpu.memory_space<vmem>>, vector<1x2x128xf32>
      %104 = vector.shape_cast %103 : vector<1x2x128xf32> to vector<2x128xf32>
      %c2_i32_45 = arith.constant 2 : i32
      %105 = arith.addi %c2_i32_45, %29 : i32
      %106 = arith.index_cast %105 : i32 to index
      %107 = arith.index_cast %100 : i32 to index
      %c0_46 = arith.constant 0 : index
      %108 = vector.load %arg6[%106, %107, %c0_46] : memref<4x8x128xf32, #tpu.memory_space<vmem>>, vector<1x2x128xf32>
      %109 = vector.shape_cast %108 : vector<1x2x128xf32> to vector<2x128xf32>
      %cst_47 = arith.constant dense<0.000000e+00> : vector<2x128xf32>
      %110 = tpu.matmul %75, %31, %cst_47 {dimension_numbers = #tpu.dot_dimension_numbers<[1], [0], [0], [1], [0, 0, 1, 1], [], []>} : vector<2x32xf32>, vector<32x128xf32>, vector<2x128xf32> -> vector<2x128xf32>
      %111 = arith.addf %104, %110 : vector<2x128xf32>
      %112 = vector.extract_strided_slice %111 {offsets = [0, 0], sizes = [2, 64], strides = [1, 1]} : vector<2x128xf32> to vector<2x64xf32>
      %113 = arith.negf %112 : vector<2x64xf32>
      %114 = math.exp %113 : vector<2x64xf32>
      %cst_48 = arith.constant 1.000000e+00 : f32
      %115 = vector.broadcast %cst_48 : f32 to vector<2x64xf32>
      %116 = arith.addf %115, %114 : vector<2x64xf32>
      %117 = arith.divf %115, %116 : vector<2x64xf32>
      %118 = vector.extract_strided_slice %111 {offsets = [0, 64], sizes = [2, 32], strides = [1, 1]} : vector<2x128xf32> to vector<2x32xf32>
      %119 = math.tanh %118 : vector<2x32xf32>
      %120 = vector.extract_strided_slice %111 {offsets = [0, 96], sizes = [2, 32], strides = [1, 1]} : vector<2x128xf32> to vector<2x32xf32>
      %121 = arith.negf %120 : vector<2x32xf32>
      %122 = math.exp %121 : vector<2x32xf32>
      %cst_49 = arith.constant 1.000000e+00 : f32
      %123 = vector.broadcast %cst_49 : f32 to vector<2x32xf32>
      %124 = arith.addf %123, %122 : vector<2x32xf32>
      %125 = arith.divf %123, %124 : vector<2x32xf32>
      %126 = vector.extract_strided_slice %117 {offsets = [0, 32], sizes = [2, 32], strides = [1, 1]} : vector<2x64xf32> to vector<2x32xf32>
      %127 = arith.mulf %126, %73 : vector<2x32xf32>
      %128 = vector.extract_strided_slice %117 {offsets = [0, 0], sizes = [2, 32], strides = [1, 1]} : vector<2x64xf32> to vector<2x32xf32>
      %129 = arith.mulf %128, %119 : vector<2x32xf32>
      %130 = arith.addf %127, %129 : vector<2x32xf32>
      %131 = math.tanh %130 : vector<2x32xf32>
      %132 = arith.mulf %125, %131 : vector<2x32xf32>
      %cst_50 = arith.constant dense<0.000000e+00> : vector<2x128xf32>
      %133 = tpu.matmul %98, %33, %cst_50 {dimension_numbers = #tpu.dot_dimension_numbers<[1], [0], [0], [1], [0, 0, 1, 1], [], []>} : vector<2x32xf32>, vector<32x128xf32>, vector<2x128xf32> -> vector<2x128xf32>
      %134 = arith.addf %109, %133 : vector<2x128xf32>
      %135 = vector.extract_strided_slice %134 {offsets = [0, 0], sizes = [2, 64], strides = [1, 1]} : vector<2x128xf32> to vector<2x64xf32>
      %136 = arith.negf %135 : vector<2x64xf32>
      %137 = math.exp %136 : vector<2x64xf32>
      %cst_51 = arith.constant 1.000000e+00 : f32
      %138 = vector.broadcast %cst_51 : f32 to vector<2x64xf32>
      %139 = arith.addf %138, %137 : vector<2x64xf32>
      %140 = arith.divf %138, %139 : vector<2x64xf32>
      %141 = vector.extract_strided_slice %134 {offsets = [0, 64], sizes = [2, 32], strides = [1, 1]} : vector<2x128xf32> to vector<2x32xf32>
      %142 = math.tanh %141 : vector<2x32xf32>
      %143 = vector.extract_strided_slice %134 {offsets = [0, 96], sizes = [2, 32], strides = [1, 1]} : vector<2x128xf32> to vector<2x32xf32>
      %144 = arith.negf %143 : vector<2x32xf32>
      %145 = math.exp %144 : vector<2x32xf32>
      %cst_52 = arith.constant 1.000000e+00 : f32
      %146 = vector.broadcast %cst_52 : f32 to vector<2x32xf32>
      %147 = arith.addf %146, %145 : vector<2x32xf32>
      %148 = arith.divf %146, %147 : vector<2x32xf32>
      %149 = vector.extract_strided_slice %140 {offsets = [0, 32], sizes = [2, 32], strides = [1, 1]} : vector<2x64xf32> to vector<2x32xf32>
      %150 = arith.mulf %149, %96 : vector<2x32xf32>
      %151 = vector.extract_strided_slice %140 {offsets = [0, 0], sizes = [2, 32], strides = [1, 1]} : vector<2x64xf32> to vector<2x32xf32>
      %152 = arith.mulf %151, %142 : vector<2x32xf32>
      %153 = arith.addf %150, %152 : vector<2x32xf32>
      %154 = math.tanh %153 : vector<2x32xf32>
      %155 = arith.mulf %148, %154 : vector<2x32xf32>
      %c2_i32_53 = arith.constant 2 : i32
      %c2_i32_54 = arith.constant 2 : i32
      %156 = arith.muli %c2_i32_53, %c2_i32_54 : i32
      %157 = tpu.assume_multiple %156, 2 : i32
      %158 = arith.index_cast %29 : i32 to index
      %159 = arith.index_cast %157 : i32 to index
      %c0_55 = arith.constant 0 : index
      %160 = vector.load %arg6[%158, %159, %c0_55] : memref<4x8x128xf32, #tpu.memory_space<vmem>>, vector<1x2x128xf32>
      %161 = vector.shape_cast %160 : vector<1x2x128xf32> to vector<2x128xf32>
      %c2_i32_56 = arith.constant 2 : i32
      %162 = arith.addi %c2_i32_56, %29 : i32
      %163 = arith.index_cast %162 : i32 to index
      %164 = arith.index_cast %157 : i32 to index
      %c0_57 = arith.constant 0 : index
      %165 = vector.load %arg6[%163, %164, %c0_57] : memref<4x8x128xf32, #tpu.memory_space<vmem>>, vector<1x2x128xf32>
      %166 = vector.shape_cast %165 : vector<1x2x128xf32> to vector<2x128xf32>
      %cst_58 = arith.constant dense<0.000000e+00> : vector<2x128xf32>
      %167 = tpu.matmul %132, %31, %cst_58 {dimension_numbers = #tpu.dot_dimension_numbers<[1], [0], [0], [1], [0, 0, 1, 1], [], []>} : vector<2x32xf32>, vector<32x128xf32>, vector<2x128xf32> -> vector<2x128xf32>
      %168 = arith.addf %161, %167 : vector<2x128xf32>
      %169 = vector.extract_strided_slice %168 {offsets = [0, 0], sizes = [2, 64], strides = [1, 1]} : vector<2x128xf32> to vector<2x64xf32>
      %170 = arith.negf %169 : vector<2x64xf32>
      %171 = math.exp %170 : vector<2x64xf32>
      %cst_59 = arith.constant 1.000000e+00 : f32
      %172 = vector.broadcast %cst_59 : f32 to vector<2x64xf32>
      %173 = arith.addf %172, %171 : vector<2x64xf32>
      %174 = arith.divf %172, %173 : vector<2x64xf32>
      %175 = vector.extract_strided_slice %168 {offsets = [0, 64], sizes = [2, 32], strides = [1, 1]} : vector<2x128xf32> to vector<2x32xf32>
      %176 = math.tanh %175 : vector<2x32xf32>
      %177 = vector.extract_strided_slice %168 {offsets = [0, 96], sizes = [2, 32], strides = [1, 1]} : vector<2x128xf32> to vector<2x32xf32>
      %178 = arith.negf %177 : vector<2x32xf32>
      %179 = math.exp %178 : vector<2x32xf32>
      %cst_60 = arith.constant 1.000000e+00 : f32
      %180 = vector.broadcast %cst_60 : f32 to vector<2x32xf32>
      %181 = arith.addf %180, %179 : vector<2x32xf32>
      %182 = arith.divf %180, %181 : vector<2x32xf32>
      %183 = vector.extract_strided_slice %174 {offsets = [0, 32], sizes = [2, 32], strides = [1, 1]} : vector<2x64xf32> to vector<2x32xf32>
      %184 = arith.mulf %183, %130 : vector<2x32xf32>
      %185 = vector.extract_strided_slice %174 {offsets = [0, 0], sizes = [2, 32], strides = [1, 1]} : vector<2x64xf32> to vector<2x32xf32>
      %186 = arith.mulf %185, %176 : vector<2x32xf32>
      %187 = arith.addf %184, %186 : vector<2x32xf32>
      %188 = math.tanh %187 : vector<2x32xf32>
      %189 = arith.mulf %182, %188 : vector<2x32xf32>
      %cst_61 = arith.constant dense<0.000000e+00> : vector<2x128xf32>
      %190 = tpu.matmul %155, %33, %cst_61 {dimension_numbers = #tpu.dot_dimension_numbers<[1], [0], [0], [1], [0, 0, 1, 1], [], []>} : vector<2x32xf32>, vector<32x128xf32>, vector<2x128xf32> -> vector<2x128xf32>
      %191 = arith.addf %166, %190 : vector<2x128xf32>
      %192 = vector.extract_strided_slice %191 {offsets = [0, 0], sizes = [2, 64], strides = [1, 1]} : vector<2x128xf32> to vector<2x64xf32>
      %193 = arith.negf %192 : vector<2x64xf32>
      %194 = math.exp %193 : vector<2x64xf32>
      %cst_62 = arith.constant 1.000000e+00 : f32
      %195 = vector.broadcast %cst_62 : f32 to vector<2x64xf32>
      %196 = arith.addf %195, %194 : vector<2x64xf32>
      %197 = arith.divf %195, %196 : vector<2x64xf32>
      %198 = vector.extract_strided_slice %191 {offsets = [0, 64], sizes = [2, 32], strides = [1, 1]} : vector<2x128xf32> to vector<2x32xf32>
      %199 = math.tanh %198 : vector<2x32xf32>
      %200 = vector.extract_strided_slice %191 {offsets = [0, 96], sizes = [2, 32], strides = [1, 1]} : vector<2x128xf32> to vector<2x32xf32>
      %201 = arith.negf %200 : vector<2x32xf32>
      %202 = math.exp %201 : vector<2x32xf32>
      %cst_63 = arith.constant 1.000000e+00 : f32
      %203 = vector.broadcast %cst_63 : f32 to vector<2x32xf32>
      %204 = arith.addf %203, %202 : vector<2x32xf32>
      %205 = arith.divf %203, %204 : vector<2x32xf32>
      %206 = vector.extract_strided_slice %197 {offsets = [0, 32], sizes = [2, 32], strides = [1, 1]} : vector<2x64xf32> to vector<2x32xf32>
      %207 = arith.mulf %206, %153 : vector<2x32xf32>
      %208 = vector.extract_strided_slice %197 {offsets = [0, 0], sizes = [2, 32], strides = [1, 1]} : vector<2x64xf32> to vector<2x32xf32>
      %209 = arith.mulf %208, %199 : vector<2x32xf32>
      %210 = arith.addf %207, %209 : vector<2x32xf32>
      %211 = math.tanh %210 : vector<2x32xf32>
      %212 = arith.mulf %205, %211 : vector<2x32xf32>
      %c3_i32 = arith.constant 3 : i32
      %c2_i32_64 = arith.constant 2 : i32
      %213 = arith.muli %c3_i32, %c2_i32_64 : i32
      %214 = tpu.assume_multiple %213, 2 : i32
      %215 = arith.index_cast %29 : i32 to index
      %216 = arith.index_cast %214 : i32 to index
      %c0_65 = arith.constant 0 : index
      %217 = vector.load %arg6[%215, %216, %c0_65] : memref<4x8x128xf32, #tpu.memory_space<vmem>>, vector<1x2x128xf32>
      %218 = vector.shape_cast %217 : vector<1x2x128xf32> to vector<2x128xf32>
      %c2_i32_66 = arith.constant 2 : i32
      %219 = arith.addi %c2_i32_66, %29 : i32
      %220 = arith.index_cast %219 : i32 to index
      %221 = arith.index_cast %214 : i32 to index
      %c0_67 = arith.constant 0 : index
      %222 = vector.load %arg6[%220, %221, %c0_67] : memref<4x8x128xf32, #tpu.memory_space<vmem>>, vector<1x2x128xf32>
      %223 = vector.shape_cast %222 : vector<1x2x128xf32> to vector<2x128xf32>
      %cst_68 = arith.constant dense<0.000000e+00> : vector<2x128xf32>
      %224 = tpu.matmul %189, %31, %cst_68 {dimension_numbers = #tpu.dot_dimension_numbers<[1], [0], [0], [1], [0, 0, 1, 1], [], []>} : vector<2x32xf32>, vector<32x128xf32>, vector<2x128xf32> -> vector<2x128xf32>
      %225 = arith.addf %218, %224 : vector<2x128xf32>
      %226 = vector.extract_strided_slice %225 {offsets = [0, 0], sizes = [2, 64], strides = [1, 1]} : vector<2x128xf32> to vector<2x64xf32>
      %227 = arith.negf %226 : vector<2x64xf32>
      %228 = math.exp %227 : vector<2x64xf32>
      %cst_69 = arith.constant 1.000000e+00 : f32
      %229 = vector.broadcast %cst_69 : f32 to vector<2x64xf32>
      %230 = arith.addf %229, %228 : vector<2x64xf32>
      %231 = arith.divf %229, %230 : vector<2x64xf32>
      %232 = vector.extract_strided_slice %225 {offsets = [0, 64], sizes = [2, 32], strides = [1, 1]} : vector<2x128xf32> to vector<2x32xf32>
      %233 = math.tanh %232 : vector<2x32xf32>
      %234 = vector.extract_strided_slice %225 {offsets = [0, 96], sizes = [2, 32], strides = [1, 1]} : vector<2x128xf32> to vector<2x32xf32>
      %235 = arith.negf %234 : vector<2x32xf32>
      %236 = math.exp %235 : vector<2x32xf32>
      %cst_70 = arith.constant 1.000000e+00 : f32
      %237 = vector.broadcast %cst_70 : f32 to vector<2x32xf32>
      %238 = arith.addf %237, %236 : vector<2x32xf32>
      %239 = arith.divf %237, %238 : vector<2x32xf32>
      %240 = vector.extract_strided_slice %231 {offsets = [0, 32], sizes = [2, 32], strides = [1, 1]} : vector<2x64xf32> to vector<2x32xf32>
      %241 = arith.mulf %240, %187 : vector<2x32xf32>
      %242 = vector.extract_strided_slice %231 {offsets = [0, 0], sizes = [2, 32], strides = [1, 1]} : vector<2x64xf32> to vector<2x32xf32>
      %243 = arith.mulf %242, %233 : vector<2x32xf32>
      %244 = arith.addf %241, %243 : vector<2x32xf32>
      %245 = math.tanh %244 : vector<2x32xf32>
      %246 = arith.mulf %239, %245 : vector<2x32xf32>
      %cst_71 = arith.constant dense<0.000000e+00> : vector<2x128xf32>
      %247 = tpu.matmul %212, %33, %cst_71 {dimension_numbers = #tpu.dot_dimension_numbers<[1], [0], [0], [1], [0, 0, 1, 1], [], []>} : vector<2x32xf32>, vector<32x128xf32>, vector<2x128xf32> -> vector<2x128xf32>
      %248 = arith.addf %223, %247 : vector<2x128xf32>
      %249 = vector.extract_strided_slice %248 {offsets = [0, 0], sizes = [2, 64], strides = [1, 1]} : vector<2x128xf32> to vector<2x64xf32>
      %250 = arith.negf %249 : vector<2x64xf32>
      %251 = math.exp %250 : vector<2x64xf32>
      %cst_72 = arith.constant 1.000000e+00 : f32
      %252 = vector.broadcast %cst_72 : f32 to vector<2x64xf32>
      %253 = arith.addf %252, %251 : vector<2x64xf32>
      %254 = arith.divf %252, %253 : vector<2x64xf32>
      %255 = vector.extract_strided_slice %248 {offsets = [0, 64], sizes = [2, 32], strides = [1, 1]} : vector<2x128xf32> to vector<2x32xf32>
      %256 = math.tanh %255 : vector<2x32xf32>
      %257 = vector.extract_strided_slice %248 {offsets = [0, 96], sizes = [2, 32], strides = [1, 1]} : vector<2x128xf32> to vector<2x32xf32>
      %258 = arith.negf %257 : vector<2x32xf32>
      %259 = math.exp %258 : vector<2x32xf32>
      %cst_73 = arith.constant 1.000000e+00 : f32
      %260 = vector.broadcast %cst_73 : f32 to vector<2x32xf32>
      %261 = arith.addf %260, %259 : vector<2x32xf32>
      %262 = arith.divf %260, %261 : vector<2x32xf32>
      %263 = vector.extract_strided_slice %254 {offsets = [0, 32], sizes = [2, 32], strides = [1, 1]} : vector<2x64xf32> to vector<2x32xf32>
      %264 = arith.mulf %263, %210 : vector<2x32xf32>
      %265 = vector.extract_strided_slice %254 {offsets = [0, 0], sizes = [2, 32], strides = [1, 1]} : vector<2x64xf32> to vector<2x32xf32>
      %266 = arith.mulf %265, %256 : vector<2x32xf32>
      %267 = arith.addf %264, %266 : vector<2x32xf32>
      %268 = math.tanh %267 : vector<2x32xf32>
      %269 = arith.mulf %262, %268 : vector<2x32xf32>
      %c4_i32 = arith.constant 4 : i32
      %c0_74 = arith.constant 0 : index
      %c0_75 = arith.constant 0 : index
      %c0_76 = arith.constant 0 : index
      %270 = vector.load %arg7[%c0_74, %c0_75, %c0_76] : memref<2x2x32xf32, #tpu.memory_space<vmem>>, vector<1x2x32xf32>
      %271 = vector.shape_cast %270 : vector<1x2x32xf32> to vector<2x32xf32>
      %272 = vector.shape_cast %246 : vector<2x32xf32> to vector<1x2x32xf32>
      tpu.vector_store %arg7[%c0_74, %c0_75, %c0_76], %272 {strides = array<i32>} : memref<2x2x32xf32, #tpu.memory_space<vmem>>, vector<1x2x32xf32>,
      %c0_77 = arith.constant 0 : index
      %c0_78 = arith.constant 0 : index
      %c0_79 = arith.constant 0 : index
      %273 = vector.load %arg8[%c0_77, %c0_78, %c0_79] : memref<2x2x32xf32, #tpu.memory_space<vmem>>, vector<1x2x32xf32>
      %274 = vector.shape_cast %273 : vector<1x2x32xf32> to vector<2x32xf32>
      %275 = vector.shape_cast %244 : vector<2x32xf32> to vector<1x2x32xf32>
      tpu.vector_store %arg8[%c0_77, %c0_78, %c0_79], %275 {strides = array<i32>} : memref<2x2x32xf32, #tpu.memory_space<vmem>>, vector<1x2x32xf32>,
      %c1_80 = arith.constant 1 : index
      %c0_81 = arith.constant 0 : index
      %c0_82 = arith.constant 0 : index
      %276 = vector.load %arg7[%c1_80, %c0_81, %c0_82] : memref<2x2x32xf32, #tpu.memory_space<vmem>>, vector<1x2x32xf32>
      %277 = vector.shape_cast %276 : vector<1x2x32xf32> to vector<2x32xf32>
      %278 = vector.shape_cast %269 : vector<2x32xf32> to vector<1x2x32xf32>
      tpu.vector_store %arg7[%c1_80, %c0_81, %c0_82], %278 {strides = array<i32>} : memref<2x2x32xf32, #tpu.memory_space<vmem>>, vector<1x2x32xf32>,
      %c1_83 = arith.constant 1 : index
      %c0_84 = arith.constant 0 : index
      %c0_85 = arith.constant 0 : index
      %279 = vector.load %arg8[%c1_83, %c0_84, %c0_85] : memref<2x2x32xf32, #tpu.memory_space<vmem>>, vector<1x2x32xf32>
      %280 = vector.shape_cast %279 : vector<1x2x32xf32> to vector<2x32xf32>
      %281 = vector.shape_cast %267 : vector<2x32xf32> to vector<1x2x32xf32>
      tpu.vector_store %arg8[%c1_83, %c0_84, %c0_85], %281 {strides = array<i32>} : memref<2x2x32xf32, #tpu.memory_space<vmem>>, vector<1x2x32xf32>,
      %c2_i32_86 = arith.constant 2 : i32
      %282 = arith.cmpi eq, %arg0, %c2_i32_86 : i32
      %283 = arith.extui %282 : i1 to i32
      %c0_i32_87 = arith.constant 0 : i32
      %284 = arith.cmpi ne, %283, %c0_i32_87 : i32
      scf.if %284 {
        %285 = tpu.concatenate %246, %269 in 1 : vector<2x32xf32>, vector<2x32xf32> -> vector<2x64xf32>
        %c0_88 = arith.constant 0 : index
        %c0_89 = arith.constant 0 : index
        %286 = vector.load %arg5[%c0_88, %c0_89] : memref<2x64xf32, #tpu.memory_space<vmem>>, vector<2x64xf32>
        tpu.vector_store %arg5[%c0_88, %c0_89], %285 {strides = array<i32>} : memref<2x64xf32, #tpu.memory_space<vmem>>, vector<2x64xf32>,
      } else {
      }
    } else {
    }
    return
  }
  func.func @transform_0(%arg0: i32) -> (i32, i32, i32) {
    %c1_i32 = arith.constant 1 : i32
    %0 = arith.minsi %arg0, %c1_i32 : i32
    %c0_i32 = arith.constant 0 : i32
    %c0_i32_0 = arith.constant 0 : i32
    %c0_i32_1 = arith.constant 0 : i32
    return %c0_i32, %0, %c0_i32_0 : i32, i32, i32
  }
  func.func @transform_1(%arg0: i32) -> (i32, i32, i32) {
    %c0_i32 = arith.constant 0 : i32
    %c0_i32_0 = arith.constant 0 : i32
    %c0_i32_1 = arith.constant 0 : i32
    %c0_i32_2 = arith.constant 0 : i32
    return %c0_i32, %c0_i32_0, %c0_i32_1 : i32, i32, i32
  }
  func.func @transform_2(%arg0: i32) -> (i32, i32, i32) {
    %c0_i32 = arith.constant 0 : i32
    %c0_i32_0 = arith.constant 0 : i32
    %c0_i32_1 = arith.constant 0 : i32
    %c0_i32_2 = arith.constant 0 : i32
    return %c0_i32, %c0_i32_0, %c0_i32_1 : i32, i32, i32
  }
  func.func @transform_3(%arg0: i32) -> (i32, i32, i32) {
    %c0_i32 = arith.constant 0 : i32
    %c0_i32_0 = arith.constant 0 : i32
    %c0_i32_1 = arith.constant 0 : i32
    %c0_i32_2 = arith.constant 0 : i32
    return %c0_i32, %c0_i32_0, %c0_i32_1 : i32, i32, i32
  }
  func.func @transform_4(%arg0: i32) -> (i32, i32) {
    %c0_i32 = arith.constant 0 : i32
    %c0_i32_0 = arith.constant 0 : i32
    %c0_i32_1 = arith.constant 0 : i32
    return %c0_i32, %c0_i32_0 : i32, i32
  }
}

</mosaic_0001>

<llo_original>
// kernel: tpu_custom_call.1
$region0: #{tpu_custom_call.1}
  #allocation0 [shape = 'u32[]', space=smem, size = 0x4, offset = 0x4, fixed_abs, tag = 'smem constant byte address 0x4 - core index']
  #allocation1 [shape = 'u32[144,128]{1,0:T(1,128)}', space=vmem, size = 0x12000, scoped, tag = 'internal scratch']
  #allocation2 [shape = 'f32[4,8,128]{2,1,0:T(8,128)}', space=vmem, size = 0x4000, scoped, tag = 'scratch operand']
  #allocation3 [shape = 'f32[2,2,32]{2,1,0:T(2,128)}', space=vmem, size = 0x800, scoped, tag = 'scratch operand']
  #allocation4 [shape = 'f32[2,2,32]{2,1,0:T(2,128)}', space=vmem, size = 0x800, scoped, tag = 'scratch operand']
  %s0 = inlined_call_operand.hbm [shape: bf16[2,16,32], index: 0, kind: input, shape index: {}]
  %s1 = inlined_call_operand.hbm [shape: bf16[2,32,128], index: 1, kind: input, shape index: {}]
  %s2 = inlined_call_operand.hbm [shape: f32[2,32,128], index: 2, kind: input, shape index: {}]
  %s3 = inlined_call_operand.vmem [shape: f32[2,1,128], index: 3, kind: input, shape index: {}]
  %s4 = inlined_call_operand.hbm [shape: f32[2,64], index: 4, kind: output, shape index: {}]
  %s5 = sld [smem:[#allocation0]]
  $region77: #{tpu_custom_call.1} parent=0
    _
  %s7 = ssub.s32 1, %s5
  %s8 = scalar_select 0, %s7, %s5
  $region1: #{tpu_custom_call.1} parent=0
    #allocation5 [shape = 'u8[8192]{0}', space=vmem, size = 0x2000, scoped, tag = 'input window, operand 0']
    #allocation6 [shape = 's32[2]{0}', space=sflag, size = 0x8, scoped, tag = 'scoped memory for tpu_custom_call.1']
    #allocation7 [shape = 's32[2]{0}', space=sflag, size = 0x8, scoped, tag = 'scoped memory for tpu_custom_call.1']
    #allocation8 [shape = 'u8[16384]{0}', space=vmem, size = 0x4000, scoped, tag = 'input window, operand 1, single buffered']
    #allocation9 [shape = 's32[1]{0}', space=sflag, size = 0x4, scoped, tag = 'scoped memory for tpu_custom_call.1']
    #allocation10 [shape = 'u8[32768]{0}', space=vmem, size = 0x8000, scoped, tag = 'input window, operand 2, single buffered']
    #allocation11 [shape = 'u8[1024]{0}', space=vmem, size = 0x400, scoped, tag = 'output window, operand 0, single buffered']
    %9 = vsyncpa [#allocation6], 0
    %s10 = scalar_lea.sflag [#allocation6], 1
    %11 = vsyncpa %s10, 0
    %12 = vsyncpa [#allocation9], 0
    %13 = vsyncpa [#allocation7], 0
    loop: start=0, step=1, limit=5
    $region2: #{tpu_custom_call.1} parent=1 // loop_pre_header
      _
    $region3: #{tpu_custom_call.1} parent=1 // loop_header
      %s15 = sphi 0, %s19
      %p16 = scmp.ge.s32.totalorder %s15, 5
      %s29 = sphi 0, %s31
      %s32 = sphi 0, %s29
      %s33 = sphi 0, %s32
      %s49 = sphi 0, %s33
      %s53 = sphi 0, %s53
      %s55 = sphi 0, %s53
      %s56 = sphi 0, %s55
      %s70 = sphi 0, %s56
      %s74 = sphi 0, %s74
      %s76 = sphi 0, %s74
      %s77 = sphi 0, %s76
      %s91 = sphi 0, %s77
      %s95 = sphi 0, %s95
      %s97 = sphi 0, %s95
      %s98 = sphi 0, %s97
      %s112 = sphi 0, %s98
      %s116 = sphi 0, %s116
      %s118 = sphi 0, %s116
      %s119 = sphi 0, %s118
      %s133 = sphi 0, %s119
    $region4: #{tpu_custom_call.1} parent=1 // loop_header_branch
      %18 = sbr.rel (%p16) target = $region8
    $region5: #{tpu_custom_call.1} parent=1 // loop_body
      %s20 = ssub.s32 %s15, 1
      %s21 = ssub.s32 %s15, 2
      %s22 = sadd.s32 %s15, 1
      %p23 = scmp.lt.s32.totalorder %s15, 1
      %s24 = scalar_select %p23, %s15, 1
      %p25 = scmp.lt.s32.totalorder %s22, 1
      %s26 = scalar_select %p25, %s22, 1
      %s27 = ssub.s32 %s24, %s26
      %p28 = scmp.eq.s32.totalorder %s27, 0
      %s30 = sadd.s32 %s29, 1
      %s31 = scalar_select %p28, %s29, %s30
      %p34 = pneg %p28
      %p35 = scmp.eq.s32.totalorder %s15, 2
      %p36 = por %p34, %p35
      %p37 = scmp.ne.s32.totalorder %s29, %s32
      %p38 = scmp.eq.s32.totalorder %s15, 0
      %p39 = por %p37, %p38
      %p40 = scmp.ne.s32.totalorder %s29, %s32
      %p41 = scmp.eq.s32.totalorder %s20, 2
      %p42 = por %p40, %p41
      %p43 = scmp.ne.s32.totalorder %s32, %s33
      %p44 = scmp.eq.s32.totalorder %s20, 0
      %p45 = por %p43, %p44
      %p46 = scmp.ne.s32.totalorder %s32, %s33
      %p47 = scmp.eq.s32.totalorder %s21, 2
      %p48 = por %p46, %p47
      %p50 = scmp.ne.s32.totalorder %s33, %s49
      %p51 = scmp.eq.s32.totalorder %s21, 0
      %p52 = por %p50, %p51
      %s54 = sadd.s32 %s53, 1
      %p57 = scmp.eq.s32.totalorder %s15, 2
      %p58 = scmp.ne.s32.totalorder %s53, %s55
      %p59 = scmp.eq.s32.totalorder %s15, 0
      %p60 = por %p58, %p59
      %p61 = scmp.ne.s32.totalorder %s53, %s55
      %p62 = scmp.eq.s32.totalorder %s20, 2
      %p63 = por %p61, %p62
      %p64 = scmp.ne.s32.totalorder %s55, %s56
      %p65 = scmp.eq.s32.totalorder %s20, 0
      %p66 = por %p64, %p65
      %p67 = scmp.ne.s32.totalorder %s55, %s56
      %p68 = scmp.eq.s32.totalorder %s21, 2
      %p69 = por %p67, %p68
      %p71 = scmp.ne.s32.totalorder %s56, %s70
      %p72 = scmp.eq.s32.totalorder %s21, 0
      %p73 = por %p71, %p72
      %s75 = sadd.s32 %s74, 1
      %p78 = scmp.eq.s32.totalorder %s15, 2
      %p79 = scmp.ne.s32.totalorder %s74, %s76
      %p80 = scmp.eq.s32.totalorder %s15, 0
      %p81 = por %p79, %p80
      %p82 = scmp.ne.s32.totalorder %s74, %s76
      %p83 = scmp.eq.s32.totalorder %s20, 2
      %p84 = por %p82, %p83
      %p85 = scmp.ne.s32.totalorder %s76, %s77
      %p86 = scmp.eq.s32.totalorder %s20, 0
      %p87 = por %p85, %p86
      %p88 = scmp.ne.s32.totalorder %s76, %s77
      %p89 = scmp.eq.s32.totalorder %s21, 2
      %p90 = por %p88, %p89
      %p92 = scmp.ne.s32.totalorder %s77, %s91
      %p93 = scmp.eq.s32.totalorder %s21, 0
      %p94 = por %p92, %p93
      %s96 = sadd.s32 %s95, 1
      %p99 = scmp.eq.s32.totalorder %s15, 2
      %p100 = scmp.ne.s32.totalorder %s95, %s97
      %p101 = scmp.eq.s32.totalorder %s15, 0
      %p102 = por %p100, %p101
      %p103 = scmp.ne.s32.totalorder %s95, %s97
      %p104 = scmp.eq.s32.totalorder %s20, 2
      %p105 = por %p103, %p104
      %p106 = scmp.ne.s32.totalorder %s97, %s98
      %p107 = scmp.eq.s32.totalorder %s20, 0
      %p108 = por %p106, %p107
      %p109 = scmp.ne.s32.totalorder %s97, %s98
      %p110 = scmp.eq.s32.totalorder %s21, 2
      %p111 = por %p109, %p110
      %p113 = scmp.ne.s32.totalorder %s98, %s112
      %p114 = scmp.eq.s32.totalorder %s21, 0
      %p115 = por %p113, %p114
      %s117 = sadd.s32 %s116, 1
      %p120 = scmp.eq.s32.totalorder %s15, 2
      %p121 = scmp.ne.s32.totalorder %s116, %s118
      %p122 = scmp.eq.s32.totalorder %s15, 0
      %p123 = por %p121, %p122
      %p124 = scmp.ne.s32.totalorder %s116, %s118
      %p125 = scmp.eq.s32.totalorder %s20, 2
      %p126 = por %p124, %p125
      %p127 = scmp.ne.s32.totalorder %s118, %s119
      %p128 = scmp.eq.s32.totalorder %s20, 0
      %p129 = por %p127, %p128
      %p130 = scmp.ne.s32.totalorder %s118, %s119
      %p131 = scmp.eq.s32.totalorder %s21, 2
      %p132 = por %p130, %p131
      %p134 = scmp.ne.s32.totalorder %s119, %s133
      %p135 = scmp.eq.s32.totalorder %s21, 0
      %p136 = por %p134, %p135
      %p137 = scmp.le.s32.totalorder 1, %s15
      %p138 = scmp.lt.s32.totalorder %s15, 4
      %p139 = pnand %p137, %p138
      %p140 = pneg %p139
      // Predicated region
      $region9: #{tpu_custom_call.1} parent=5 // pred_check
        _
      $region10: #{tpu_custom_call.1} parent=5 // pred_check_branch
        %142 = sbr.rel (%p139) target = $region12
      $region11: #{tpu_custom_call.1} parent=5 // pred_region
        %s143 = ssub.s32 %s15, 1
        // Predicated region
        $region13: #{tpu_custom_call.1} parent=11 // pred_check
          %p144 = pneg %p66
        $region14: #{tpu_custom_call.1} parent=11 // pred_check_branch
          %146 = sbr.rel (%p144) target = $region16
        $region15: #{tpu_custom_call.1} parent=11 // pred_region
          %s148 = ssub.s32 512, 512
          %149 = vsyncadd [#allocation9], %s148
          %s150 = sshll.u32 [#allocation8], 4
          %s151 = int_to_ptr.vmem [resolvable:$true] %s150
          %156 = dma.hbm_to_vmem [thread:$0]  %s1, 512, %s151, [#allocation9], 64, 64, 4
        $region16: #{tpu_custom_call.1} parent=11 // pred_fallthru
          _
        // Predicated region
        $region17: #{tpu_custom_call.1} parent=11 // pred_check
          %p157 = pneg %p87
        $region18: #{tpu_custom_call.1} parent=11 // pred_check_branch
          %159 = sbr.rel (%p157) target = $region20
        $region19: #{tpu_custom_call.1} parent=11 // pred_region
          %s161 = ssub.s32 1024, 1024
          %162 = vsyncadd [#allocation9], %s161
          %s163 = sshll.u32 [#allocation10], 4
          %s164 = int_to_ptr.vmem [resolvable:$true] %s163
          %169 = dma.hbm_to_vmem [thread:$0]  %s2, 1024, %s164, [#allocation9], 128, 128, 8
        $region20: #{tpu_custom_call.1} parent=11 // pred_fallthru
          _
        // Predicated region
        $region21: #{tpu_custom_call.1} parent=11 // pred_check
          %p170 = pneg %p108
        $region22: #{tpu_custom_call.1} parent=11 // pred_check_branch
          %172 = sbr.rel (%p170) target = $region24
        $region23: #{tpu_custom_call.1} parent=11 // pred_region
          _
        $region24: #{tpu_custom_call.1} parent=11 // pred_fallthru
          _
      $region12: #{tpu_custom_call.1} parent=5 // pred_fallthru
        _
      %p173 = scmp.lt.s32.totalorder %s15, 3
      // Predicated region
      $region25: #{tpu_custom_call.1} parent=5 // pred_check
        %p174 = pneg %p173
      $region26: #{tpu_custom_call.1} parent=5 // pred_check_branch
        %176 = sbr.rel (%p174) target = $region28
      $region27: #{tpu_custom_call.1} parent=5 // pred_region
        // Predicated region
        $region29: #{tpu_custom_call.1} parent=27 // pred_check
          %p177 = pneg %p39
        $region30: #{tpu_custom_call.1} parent=27 // pred_check_branch
          %179 = sbr.rel (%p177) target = $region32
        $region31: #{tpu_custom_call.1} parent=27 // pred_region
          %s180 = sand.u32 %s29, 1
          %s181 = scalar_lea.sflag [#allocation6], %s180
          %s182 = sand.u32 %s29, 1
          %s183 = smul.addr %s182, 8
          %s184 = scalar_lea.vmem [#allocation5], %s183
          %p185 = scmp.lt.s32.totalorder %s15, 1
          %s186 = scalar_select %p185, %s15, 1
          %s188 = ssub.s32 128, 128
          %189 = vsyncadd %s181, %s188
          %s190 = smul.addr %s186, 64
          %s191 = scalar_lea.hbm %s0, %s190
          %s192 = sshll.u32 %s184, 4
          %s193 = int_to_ptr.vmem [resolvable:$true] %s192
          %198 = dma.hbm_to_vmem [thread:$0]  %s191, 128, %s193, %s181, 128, 64, 4
        $region32: #{tpu_custom_call.1} parent=27 // pred_fallthru
          _
      $region28: #{tpu_custom_call.1} parent=5 // pred_fallthru
        _
      %p199 = scmp.le.s32.totalorder 1, %s15
      %p200 = scmp.lt.s32.totalorder %s15, 4
      %p201 = pnand %p199, %p200
      %p202 = pneg %p201
      // Predicated region
      $region33: #{tpu_custom_call.1} parent=5 // pred_check
        _
      $region34: #{tpu_custom_call.1} parent=5 // pred_check_branch
        %204 = sbr.rel (%p201) target = $region36
      $region35: #{tpu_custom_call.1} parent=5 // pred_region
        %s205 = ssub.s32 %s15, 1
        %s206 = sand.u32 %s32, 1
        %s207 = scalar_lea.sflag [#allocation6], %s206
        %s208 = sand.u32 %s32, 1
        %s209 = smul.addr %s208, 8
        %s210 = scalar_lea.vmem [#allocation5], %s209
        // Predicated region
        $region37: #{tpu_custom_call.1} parent=35 // pred_check
          %p211 = pneg %p45
        $region38: #{tpu_custom_call.1} parent=35 // pred_check_branch
          %213 = sbr.rel (%p211) target = $region40
        $region39: #{tpu_custom_call.1} parent=35 // pred_region
          %214 = dma.done %s207, 128
        $region40: #{tpu_custom_call.1} parent=35 // pred_fallthru
          _
        // Predicated region
        $region41: #{tpu_custom_call.1} parent=35 // pred_check
          %p215 = pneg %p66
        $region42: #{tpu_custom_call.1} parent=35 // pred_check_branch
          %217 = sbr.rel (%p215) target = $region44
        $region43: #{tpu_custom_call.1} parent=35 // pred_region
          %218 = dma.done [#allocation9], 512
        $region44: #{tpu_custom_call.1} parent=35 // pred_fallthru
          _
        // Predicated region
        $region45: #{tpu_custom_call.1} parent=35 // pred_check
          %p219 = pneg %p87
        $region46: #{tpu_custom_call.1} parent=35 // pred_check_branch
          %221 = sbr.rel (%p219) target = $region48
        $region47: #{tpu_custom_call.1} parent=35 // pred_region
          %222 = dma.done [#allocation9], 1024
        $region48: #{tpu_custom_call.1} parent=35 // pred_fallthru
          _
        %s223 = sand.u32 %s32, 1
        %s224 = scalar_lea.sflag [#allocation6], %s223
        %s225 = sand.u32 %s32, 1
        %s226 = smul.addr %s225, 8
        %s227 = scalar_lea.vmem [#allocation5], %s226
        %p228 = pneg %p45
        %p229 = pneg %p42
        %p230 = pneg %p66
        %p231 = pneg %p63
        %p232 = pneg %p87
        %p233 = pneg %p84
        %p234 = pneg %p108
        %p235 = pneg %p105
        %p236 = pneg %p129
        %p237 = pneg %p126
        %p238 = scmp.lt.s32.totalorder %s20, 1
        %s239 = scalar_select %p238, %s20, 1
        %p241 = scmp.lt.s32.totalorder %s20, 0
        %s242 = ssub.s32 0, %s20
        %s243 = scalar_select %p241, %s242, %s20
        %s244 = sand.u32 %s243, 1
        %s245 = ssub.s32 0, %s244
        %s246 = scalar_select %p241, %s245, %s244
        %p247 = scmp.ne.s32.totalorder %s246, 0
        %p248 = scmp.lt.s32.totalorder %s246, 0
        %p249 = pnand %p248, %p247
        %p250 = pneg %p249
        %s251 = sadd.s32 %s246, 2
        %s252 = scalar_select %p250, %s251, %s246
        %p253 = scmp.eq.s32.totalorder %s20, 0
        // Predicated region
        $region49: #{tpu_custom_call.1} parent=35 // pred_check
          %p254 = pneg %p253
        $region50: #{tpu_custom_call.1} parent=35 // pred_check_branch
          %256 = sbr.rel (%p254) target = $region52
        $region51: #{tpu_custom_call.1} parent=35 // pred_region
          %vm257 = vcmask 254976
          %258 = vst.msk [vmem:[#allocation3] sm:$0x3] %vm257, 0.0
          %259 = vst.msk [vmem:[#allocation3 + $0x2] sm:$0x3] %vm257, 0.0
          %260 = vst.msk [vmem:[#allocation4] sm:$0x3] %vm257, 0.0
          %261 = vst.msk [vmem:[#allocation4 + $0x2] sm:$0x3] %vm257, 0.0
        $region52: #{tpu_custom_call.1} parent=35 // pred_fallthru
          _
        %p262 = scmp.lt.s32.totalorder %s20, 2
        // Predicated region
        $region53: #{tpu_custom_call.1} parent=35 // pred_check
          %p263 = pneg %p262
        $region54: #{tpu_custom_call.1} parent=35 // pred_check_branch
          %265 = sbr.rel (%p263) target = $region56
        $region55: #{tpu_custom_call.1} parent=35 // pred_region
          %v266 = vld [vmem:[%s210] sm:$0xf]
          %v267 = vld [vmem:[#allocation8] sm:$0xf]
          %v268 = vld [vmem:[#allocation8 + $0x4] sm:$0xf]
          %v269 = vld [vmem:[#allocation8 + $0x8] sm:$0xf]
          %v270 = vld [vmem:[#allocation8 + $0xc] sm:$0xf]
          %v271 = vld [vmem:[%s3] sm:$0x1]
          %v273 = vlaneseq
          %v274 = vshrl.u32 %v273, 7
          %v275 = vsub.s32 0, %v274
          %v276 = vrot.slane %v271, %v275
          %v282 = vunpack.c.l.b16 %v267
          %v283 = vunpack.c.l.b16 %v268
          %v284 = vunpack.c.l.b16 %v269
          %v285 = vunpack.c.l.b16 %v270
          %v286 = vpack.c.b16 %v283, %v282
          %v287 = vpack.c.b16 %v285, %v284
          %vm290 = vcmask 261120
          %v292 = vsel %vm290, %v266, 0
          %294 = vmatprep.subr.bf16.mxu0 0
          %295 = vmatpush1.bf16.msra.mxu0 0
          %296 = vmatprep.subr.bf16.mxu0 0
          %297 = vmatpush1.bf16.msra.mxu0 0
          %298 = vmatprep.subr.bf16.mxu0 0
          %299 = vmatpush1.bf16.msra.mxu0 0
          %300 = vmatprep.subr.bf16.mxu0 0
          %301 = vmatpush1.bf16.msra.mxu0 0
          %302 = vmatprep.subr.bf16.mxu0 0
          %303 = vmatpush1.bf16.msra.mxu0 0
          %304 = vmatprep.subr.bf16.mxu0 0
          %305 = vmatpush1.bf16.msra.mxu0 0
          %306 = vmatprep.subr.bf16.mxu0 0
          %307 = vmatpush1.bf16.msra.mxu0 %v287
          %308 = vmatprep.subr.bf16.mxu0 0
          %309 = vmatpush1.bf16.msra.mxu0 %v286
          %310 = vmatprep.subr.bf16.mxu0 0
          %311 = vmatpush2.bf16.msra.mxu0 0
          %312 = vmatprep.subr.bf16.mxu0 0
          %313 = vmatpush2.bf16.msra.mxu0 0
          %314 = vmatprep.subr.bf16.mxu0 0
          %315 = vmatpush2.bf16.msra.mxu0 0
          %316 = vmatprep.subr.bf16.mxu0 0
          %317 = vmatpush2.bf16.msra.mxu0 0
          %318 = vmatprep.subr.bf16.mxu0 0
          %319 = vmatpush2.bf16.msra.mxu0 0
          %320 = vmatprep.subr.bf16.mxu0 0
          %321 = vmatpush2.bf16.msra.mxu0 0
          %322 = vmatprep.subr.bf16.mxu0 0
          %323 = vmatpush2.bf16.msra.mxu0 0
          %324 = vmatprep.subr.bf16.mxu0 0
          %325 = vmatpush2.bf16.msra.mxu0 0
          %326 = vmatprep.mubr.bf16.mxu0 0
          %327 = vmatmul.mubr.bf16.gmra.mxu0 %v292
          %v328 = vpop.f32.mrf.mxu0
          %v329 = vadd.f32 %v276, %v328
          %v330 = vpop.f32.mrf.mxu0
          %v331 = vpop.f32.mrf.mxu0
          %v332 = vpop.f32.mrf.mxu0
          %333 = vdwg.mxu0
          %s334 = scalar_lea.vmem %s210, 4 [#allocation5]
          %v335 = vld [vmem:[%s334] sm:$0xf]
          %s336 = scalar_lea.vmem [#allocation8], 16
          %v337 = vld [vmem:[%s336] sm:$0xf]
          %v338 = vld [vmem:[%s336 + $0x4] sm:$0xf]
          %v339 = vld [vmem:[%s336 + $0x8] sm:$0xf]
          %v340 = vld [vmem:[%s336 + $0xc] sm:$0xf]
          %s341 = scalar_lea.vmem %s3, 1
          %v342 = vld [vmem:[%s341] sm:$0x1]
          %v344 = vlaneseq
          %v345 = vshrl.u32 %v344, 7
          %v346 = vsub.s32 0, %v345
          %v347 = vrot.slane %v342, %v346
          %v353 = vunpack.c.l.b16 %v337
          %v354 = vunpack.c.l.b16 %v338
          %v355 = vunpack.c.l.b16 %v339
          %v356 = vunpack.c.l.b16 %v340
          %v357 = vpack.c.b16 %v354, %v353
          %v358 = vpack.c.b16 %v356, %v355
          %v362 = vsel %vm290, %v335, 0
          %364 = vmatprep.subr.bf16.mxu0 0
          %365 = vmatpush1.bf16.msra.mxu0 0
          %366 = vmatprep.subr.bf16.mxu0 0
          %367 = vmatpush1.bf16.msra.mxu0 0
          %368 = vmatprep.subr.bf16.mxu0 0
          %369 = vmatpush1.bf16.msra.mxu0 0
          %370 = vmatprep.subr.bf16.mxu0 0
          %371 = vmatpush1.bf16.msra.mxu0 0
          %372 = vmatprep.subr.bf16.mxu0 0
          %373 = vmatpush1.bf16.msra.mxu0 0
          %374 = vmatprep.subr.bf16.mxu0 0
          %375 = vmatpush1.bf16.msra.mxu0 0
          %376 = vmatprep.subr.bf16.mxu0 0
          %377 = vmatpush1.bf16.msra.mxu0 %v358
          %378 = vmatprep.subr.bf16.mxu0 0
          %379 = vmatpush1.bf16.msra.mxu0 %v357
          %380 = vmatprep.subr.bf16.mxu0 0
          %381 = vmatpush2.bf16.msra.mxu0 0
          %382 = vmatprep.subr.bf16.mxu0 0
          %383 = vmatpush2.bf16.msra.mxu0 0
          %384 = vmatprep.subr.bf16.mxu0 0
          %385 = vmatpush2.bf16.msra.mxu0 0
          %386 = vmatprep.subr.bf16.mxu0 0
          %387 = vmatpush2.bf16.msra.mxu0 0
          %388 = vmatprep.subr.bf16.mxu0 0
          %389 = vmatpush2.bf16.msra.mxu0 0
          %390 = vmatprep.subr.bf16.mxu0 0
          %391 = vmatpush2.bf16.msra.mxu0 0
          %392 = vmatprep.subr.bf16.mxu0 0
          %393 = vmatpush2.bf16.msra.mxu0 0
          %394 = vmatprep.subr.bf16.mxu0 0
          %395 = vmatpush2.bf16.msra.mxu0 0
          %396 = vmatprep.mubr.bf16.mxu0 0
          %397 = vmatmul.mubr.bf16.gmra.mxu0 %v362
          %v398 = vpop.f32.mrf.mxu0
          %v399 = vadd.f32 %v347, %v398
          %v400 = vpop.f32.mrf.mxu0
          %v401 = vpop.f32.mrf.mxu0
          %v402 = vpop.f32.mrf.mxu0
          %403 = vdwg.mxu0
          %s404 = smul.u32 %s252, 8
          %s405 = scalar_lea.vmem [#allocation2], %s404
          %406 = vst [vmem:[%s405] sm:$0xff] %v329
          %s407 = sadd.s32 %s252, 2
          %s408 = smul.u32 %s407, 8
          %s409 = scalar_lea.vmem [#allocation2], %s408
          %410 = vst [vmem:[%s409] sm:$0xff] %v399
        $region56: #{tpu_custom_call.1} parent=35 // pred_fallthru
          _
        %p411 = scmp.gt.s32.totalorder %s20, 0
        // Predicated region
        $region57: #{tpu_custom_call.1} parent=35 // pred_check
          %p412 = pneg %p411
        $region58: #{tpu_custom_call.1} parent=35 // pred_check_branch
          %414 = sbr.rel (%p412) target = $region60
        $region59: #{tpu_custom_call.1} parent=35 // pred_region
          %s415 = sadd.s32 %s20, 1
          %p416 = scmp.lt.s32.totalorder %s415, 0
          %s417 = ssub.s32 0, %s415
          %s418 = scalar_select %p416, %s417, %s415
          %s419 = sand.u32 %s418, 1
          %s420 = ssub.s32 0, %s419
          %s421 = scalar_select %p416, %s420, %s419
          %p422 = scmp.ne.s32.totalorder %s421, 0
          %p423 = scmp.lt.s32.totalorder %s421, 0
          %p424 = pnand %p423, %p422
          %p425 = pneg %p424
          %s426 = sadd.s32 %s421, 2
          %s427 = scalar_select %p425, %s426, %s421
          %v428 = vld [vmem:[#allocation10] sm:$0xff]
          %v429 = vld [vmem:[#allocation10 + $0x8] sm:$0xff]
          %v430 = vld [vmem:[#allocation10 + $0x10] sm:$0xff]
          %v431 = vld [vmem:[#allocation10 + $0x18] sm:$0xff]
          %s432 = scalar_lea.vmem [#allocation10], 32
          %v433 = vld [vmem:[%s432] sm:$0xff]
          %v434 = vld [vmem:[%s432 + $0x8] sm:$0xff]
          %v435 = vld [vmem:[%s432 + $0x10] sm:$0xff]
          %v436 = vld [vmem:[%s432 + $0x18] sm:$0xff]
          %v437 = vld [vmem:[#allocation3] sm:$0x3]
          %v438 = vld [vmem:[#allocation4] sm:$0x3]
          %s439 = scalar_lea.vmem [#allocation3], 2
          %v440 = vld [vmem:[%s439] sm:$0x3]
          %s441 = scalar_lea.vmem [#allocation4], 2
          %v442 = vld [vmem:[%s441] sm:$0x3]
          %s443 = smul.u32 %s427, 8
          %s444 = sadd.s32 0, %s443
          %s445 = scalar_lea.vmem [#allocation2], %s444
          %v446 = vld [vmem:[%s445] sm:$0x3]
          %s447 = sadd.s32 %s427, 2
          %s448 = smul.u32 %s447, 8
          %s449 = sadd.s32 0, %s448
          %s450 = scalar_lea.vmem [#allocation2], %s449
          %v451 = vld [vmem:[%s450] sm:$0x3]
          %vm452 = vcmask 261120
          %v454 = vsel %vm452, %v437, 0
          %456 = vmatprep.subr.mxu0 0.0
          %457 = vmatpush1.msra.mxu0 0.0
          %458 = vmatprep.subr.mxu0 0.0
          %459 = vmatpush1.msra.mxu0 0.0
          %460 = vmatprep.subr.mxu0 0.0
          %461 = vmatpush1.msra.mxu0 0.0
          %462 = vmatprep.subr.mxu0 0.0
          %463 = vmatpush1.msra.mxu0 0.0
          %464 = vmatprep.subr.mxu0 0.0
          %465 = vmatpush1.msra.mxu0 0.0
          %466 = vmatprep.subr.mxu0 0.0
          %467 = vmatpush1.msra.mxu0 0.0
          %468 = vmatprep.subr.mxu0 0.0
          %469 = vmatpush1.msra.mxu0 0.0
          %470 = vmatprep.subr.mxu0 0.0
          %471 = vmatpush1.msra.mxu0 0.0
          %472 = vmatprep.subr.mxu0 0.0
          %473 = vmatpush1.msra.mxu0 0.0
          %474 = vmatprep.subr.mxu0 0.0
          %475 = vmatpush1.msra.mxu0 0.0
          %476 = vmatprep.subr.mxu0 0.0
          %477 = vmatpush1.msra.mxu0 0.0
          %478 = vmatprep.subr.mxu0 0.0
          %479 = vmatpush1.msra.mxu0 0.0
          %480 = vmatprep.subr.mxu0 0.0
          %481 = vmatpush1.msra.mxu0 %v431
          %482 = vmatprep.subr.mxu0 0.0
          %483 = vmatpush1.msra.mxu0 %v430
          %484 = vmatprep.subr.mxu0 0.0
          %485 = vmatpush1.msra.mxu0 %v429
          %486 = vmatprep.subr.mxu0 0.0
          %487 = vmatpush1.msra.mxu0 %v428
          %488 = vmatprep.subr.mxu0 0.0
          %489 = vmatpush2.msra.mxu0 0.0
          %490 = vmatprep.subr.mxu0 0.0
          %491 = vmatpush2.msra.mxu0 0.0
          %492 = vmatprep.subr.mxu0 0.0
          %493 = vmatpush2.msra.mxu0 0.0
          %494 = vmatprep.subr.mxu0 0.0
          %495 = vmatpush2.msra.mxu0 0.0
          %496 = vmatprep.subr.mxu0 0.0
          %497 = vmatpush2.msra.mxu0 0.0
          %498 = vmatprep.subr.mxu0 0.0
          %499 = vmatpush2.msra.mxu0 0.0
          %500 = vmatprep.subr.mxu0 0.0
          %501 = vmatpush2.msra.mxu0 0.0
          %502 = vmatprep.subr.mxu0 0.0
          %503 = vmatpush2.msra.mxu0 0.0
          %504 = vmatprep.subr.mxu0 0.0
          %505 = vmatpush2.msra.mxu0 0.0
          %506 = vmatprep.subr.mxu0 0.0
          %507 = vmatpush2.msra.mxu0 0.0
          %508 = vmatprep.subr.mxu0 0.0
          %509 = vmatpush2.msra.mxu0 0.0
          %510 = vmatprep.subr.mxu0 0.0
          %511 = vmatpush2.msra.mxu0 0.0
          %512 = vmatprep.subr.mxu0 0.0
          %513 = vmatpush2.msra.mxu0 0.0
          %514 = vmatprep.subr.mxu0 0.0
          %515 = vmatpush2.msra.mxu0 0.0
          %516 = vmatprep.subr.mxu0 0.0
          %517 = vmatpush2.msra.mxu0 0.0
          %518 = vmatprep.subr.mxu0 0.0
          %519 = vmatpush2.msra.mxu0 0.0
          %520 = vmatprep.mubr.f32.mxu0 0.0
          %521 = vmatmul.mubr.f32.gmra.mxu0 %v454
          %v522 = vpop.f32.mrf.mxu0
          %v523 = vadd.f32 0.0, %v522
          %v524 = vpop.f32.mrf.mxu0
          %525 = vdwg.mxu0
          %v526 = vadd.f32 %v446, %v523
          %v527 = vxor.u32 %v526, 2147483648
          %v528 = vmul.f32 %v527, 1.442695
          %v529 = vpow.pop %v528
          %v530 = vadd.f32 %v529, 1.0
          %v531 = vrcp.pop %v530
          %v532 = vmul.f32 1.0, %v531
          %v533 = vtanh.pop %v526
          %535 = vrot.lane.b32.xlu0 %v438, 32
          %v536 = vpop.permute.xlu0 %535
          %v538 = vmul.f32 %v532, %v536
          %540 = vrot.lane.b32.xlu0 %v533, 64
          %v541 = vpop.permute.xlu0 %540
          %v543 = vmul.f32 %v532, %v541
          %545 = vrot.lane.b32.xlu0 %v543, 32
          %v546 = vpop.permute.xlu0 %545
          %v548 = vadd.f32 %v538, %v546
          %v549 = vtanh.pop %v548
          %551 = vrot.lane.b32.xlu0 %v549, 64
          %v552 = vpop.permute.xlu0 %551
          %v554 = vmul.f32 %v532, %v552
          %v556 = vsel %vm452, %v440, 0
          %558 = vmatprep.subr.mxu0 0.0
          %559 = vmatpush1.msra.mxu0 0.0
          %560 = vmatprep.subr.mxu0 0.0
          %561 = vmatpush1.msra.mxu0 0.0
          %562 = vmatprep.subr.mxu0 0.0
          %563 = vmatpush1.msra.mxu0 0.0
          %564 = vmatprep.subr.mxu0 0.0
          %565 = vmatpush1.msra.mxu0 0.0
          %566 = vmatprep.subr.mxu0 0.0
          %567 = vmatpush1.msra.mxu0 0.0
          %568 = vmatprep.subr.mxu0 0.0
          %569 = vmatpush1.msra.mxu0 0.0
          %570 = vmatprep.subr.mxu0 0.0
          %571 = vmatpush1.msra.mxu0 0.0
          %572 = vmatprep.subr.mxu0 0.0
          %573 = vmatpush1.msra.mxu0 0.0
          %574 = vmatprep.subr.mxu0 0.0
          %575 = vmatpush1.msra.mxu0 0.0
          %576 = vmatprep.subr.mxu0 0.0
          %577 = vmatpush1.msra.mxu0 0.0
          %578 = vmatprep.subr.mxu0 0.0
          %579 = vmatpush1.msra.mxu0 0.0
          %580 = vmatprep.subr.mxu0 0.0
          %581 = vmatpush1.msra.mxu0 0.0
          %582 = vmatprep.subr.mxu0 0.0
          %583 = vmatpush1.msra.mxu0 %v436
          %584 = vmatprep.subr.mxu0 0.0
          %585 = vmatpush1.msra.mxu0 %v435
          %586 = vmatprep.subr.mxu0 0.0
          %587 = vmatpush1.msra.mxu0 %v434
          %588 = vmatprep.subr.mxu0 0.0
          %589 = vmatpush1.msra.mxu0 %v433
          %590 = vmatprep.subr.mxu0 0.0
          %591 = vmatpush2.msra.mxu0 0.0
          %592 = vmatprep.subr.mxu0 0.0
          %593 = vmatpush2.msra.mxu0 0.0
          %594 = vmatprep.subr.mxu0 0.0
          %595 = vmatpush2.msra.mxu0 0.0
          %596 = vmatprep.subr.mxu0 0.0
          %597 = vmatpush2.msra.mxu0 0.0
          %598 = vmatprep.subr.mxu0 0.0
          %599 = vmatpush2.msra.mxu0 0.0
          %600 = vmatprep.subr.mxu0 0.0
          %601 = vmatpush2.msra.mxu0 0.0
          %602 = vmatprep.subr.mxu0 0.0
          %603 = vmatpush2.msra.mxu0 0.0
          %604 = vmatprep.subr.mxu0 0.0
          %605 = vmatpush2.msra.mxu0 0.0
          %606 = vmatprep.subr.mxu0 0.0
          %607 = vmatpush2.msra.mxu0 0.0
          %608 = vmatprep.subr.mxu0 0.0
          %609 = vmatpush2.msra.mxu0 0.0
          %610 = vmatprep.subr.mxu0 0.0
          %611 = vmatpush2.msra.mxu0 0.0
          %612 = vmatprep.subr.mxu0 0.0
          %613 = vmatpush2.msra.mxu0 0.0
          %614 = vmatprep.subr.mxu0 0.0
          %615 = vmatpush2.msra.mxu0 0.0
          %616 = vmatprep.subr.mxu0 0.0
          %617 = vmatpush2.msra.mxu0 0.0
          %618 = vmatprep.subr.mxu0 0.0
          %619 = vmatpush2.msra.mxu0 0.0
          %620 = vmatprep.subr.mxu0 0.0
          %621 = vmatpush2.msra.mxu0 0.0
          %622 = vmatprep.mubr.f32.mxu0 0.0
          %623 = vmatmul.mubr.f32.gmra.mxu0 %v556
          %v624 = vpop.f32.mrf.mxu0
          %v625 = vadd.f32 0.0, %v624
          %v626 = vpop.f32.mrf.mxu0
          %627 = vdwg.mxu0
          %v628 = vadd.f32 %v451, %v625
          %v629 = vxor.u32 %v628, 2147483648
          %v630 = vmul.f32 %v629, 1.442695
          %v631 = vpow.pop %v630
          %v632 = vadd.f32 %v631, 1.0
          %v633 = vrcp.pop %v632
          %v634 = vmul.f32 1.0, %v633
          %v635 = vtanh.pop %v628
          %637 = vrot.lane.b32.xlu0 %v442, 32
          %v638 = vpop.permute.xlu0 %637
          %v640 = vmul.f32 %v634, %v638
          %642 = vrot.lane.b32.xlu0 %v635, 64
          %v643 = vpop.permute.xlu0 %642
          %v645 = vmul.f32 %v634, %v643
          %647 = vrot.lane.b32.xlu0 %v645, 32
          %v648 = vpop.permute.xlu0 %647
          %v650 = vadd.f32 %v640, %v648
          %v651 = vtanh.pop %v650
          %653 = vrot.lane.b32.xlu0 %v651, 64
          %v654 = vpop.permute.xlu0 %653
          %v656 = vmul.f32 %v634, %v654
          %s657 = sadd.s32 2, %s443
          %s658 = scalar_lea.vmem [#allocation2], %s657
          %v659 = vld [vmem:[%s658] sm:$0x3]
          %s660 = sadd.s32 2, %s448
          %s661 = scalar_lea.vmem [#allocation2], %s660
          %v662 = vld [vmem:[%s661] sm:$0x3]
          %664 = vrot.lane.b32.xlu0 %v554, 32
          %v665 = vpop.permute.xlu0 %664
          %v666 = vsel %vm452, %v665, 0
          %668 = vmatprep.subr.mxu0 0.0
          %669 = vmatpush1.msra.mxu0 0.0
          %670 = vmatprep.subr.mxu0 0.0
          %671 = vmatpush1.msra.mxu0 0.0
          %672 = vmatprep.subr.mxu0 0.0
          %673 = vmatpush1.msra.mxu0 0.0
          %674 = vmatprep.subr.mxu0 0.0
          %675 = vmatpush1.msra.mxu0 0.0
          %676 = vmatprep.subr.mxu0 0.0
          %677 = vmatpush1.msra.mxu0 0.0
          %678 = vmatprep.subr.mxu0 0.0
          %679 = vmatpush1.msra.mxu0 0.0
          %680 = vmatprep.subr.mxu0 0.0
          %681 = vmatpush1.msra.mxu0 0.0
          %682 = vmatprep.subr.mxu0 0.0
          %683 = vmatpush1.msra.mxu0 0.0
          %684 = vmatprep.subr.mxu0 0.0
          %685 = vmatpush1.msra.mxu0 0.0
          %686 = vmatprep.subr.mxu0 0.0
          %687 = vmatpush1.msra.mxu0 0.0
          %688 = vmatprep.subr.mxu0 0.0
          %689 = vmatpush1.msra.mxu0 0.0
          %690 = vmatprep.subr.mxu0 0.0
          %691 = vmatpush1.msra.mxu0 0.0
          %692 = vmatprep.subr.mxu0 0.0
          %693 = vmatpush1.msra.mxu0 %v431
          %694 = vmatprep.subr.mxu0 0.0
          %695 = vmatpush1.msra.mxu0 %v430
          %696 = vmatprep.subr.mxu0 0.0
          %697 = vmatpush1.msra.mxu0 %v429
          %698 = vmatprep.subr.mxu0 0.0
          %699 = vmatpush1.msra.mxu0 %v428
          %700 = vmatprep.subr.mxu0 0.0
          %701 = vmatpush2.msra.mxu0 0.0
          %702 = vmatprep.subr.mxu0 0.0
          %703 = vmatpush2.msra.mxu0 0.0
          %704 = vmatprep.subr.mxu0 0.0
          %705 = vmatpush2.msra.mxu0 0.0
          %706 = vmatprep.subr.mxu0 0.0
          %707 = vmatpush2.msra.mxu0 0.0
          %708 = vmatprep.subr.mxu0 0.0
          %709 = vmatpush2.msra.mxu0 0.0
          %710 = vmatprep.subr.mxu0 0.0
          %711 = vmatpush2.msra.mxu0 0.0
          %712 = vmatprep.subr.mxu0 0.0
          %713 = vmatpush2.msra.mxu0 0.0
          %714 = vmatprep.subr.mxu0 0.0
          %715 = vmatpush2.msra.mxu0 0.0
          %716 = vmatprep.subr.mxu0 0.0
          %717 = vmatpush2.msra.mxu0 0.0
          %718 = vmatprep.subr.mxu0 0.0
          %719 = vmatpush2.msra.mxu0 0.0
          %720 = vmatprep.subr.mxu0 0.0
          %721 = vmatpush2.msra.mxu0 0.0
          %722 = vmatprep.subr.mxu0 0.0
          %723 = vmatpush2.msra.mxu0 0.0
          %724 = vmatprep.subr.mxu0 0.0
          %725 = vmatpush2.msra.mxu0 0.0
          %726 = vmatprep.subr.mxu0 0.0
          %727 = vmatpush2.msra.mxu0 0.0
          %728 = vmatprep.subr.mxu0 0.0
          %729 = vmatpush2.msra.mxu0 0.0
          %730 = vmatprep.subr.mxu0 0.0
          %731 = vmatpush2.msra.mxu0 0.0
          %732 = vmatprep.mubr.f32.mxu0 0.0
          %733 = vmatmul.mubr.f32.gmra.mxu0 %v666
          %v734 = vpop.f32.mrf.mxu0
          %v735 = vadd.f32 0.0, %v734
          %v736 = vpop.f32.mrf.mxu0
          %737 = vdwg.mxu0
          %v738 = vadd.f32 %v659, %v735
          %v739 = vxor.u32 %v738, 2147483648
          %v740 = vmul.f32 %v739, 1.442695
          %v741 = vpow.pop %v740
          %v742 = vadd.f32 %v741, 1.0
          %v743 = vrcp.pop %v742
          %v744 = vmul.f32 1.0, %v743
          %v745 = vtanh.pop %v738
          %v746 = vmul.f32 %v744, %v548
          %748 = vrot.lane.b32.xlu0 %v745, 64
          %v749 = vpop.permute.xlu0 %748
          %v751 = vmul.f32 %v744, %v749
          %753 = vrot.lane.b32.xlu0 %v751, 32
          %v754 = vpop.permute.xlu0 %753
          %v756 = vadd.f32 %v746, %v754
          %v757 = vtanh.pop %v756
          %759 = vrot.lane.b32.xlu0 %v757, 64
          %v760 = vpop.permute.xlu0 %759
          %v762 = vmul.f32 %v744, %v760
          %764 = vrot.lane.b32.xlu0 %v656, 32
          %v765 = vpop.permute.xlu0 %764
          %v766 = vsel %vm452, %v765, 0
          %768 = vmatprep.subr.mxu0 0.0
          %769 = vmatpush1.msra.mxu0 0.0
          %770 = vmatprep.subr.mxu0 0.0
          %771 = vmatpush1.msra.mxu0 0.0
          %772 = vmatprep.subr.mxu0 0.0
          %773 = vmatpush1.msra.mxu0 0.0
          %774 = vmatprep.subr.mxu0 0.0
          %775 = vmatpush1.msra.mxu0 0.0
          %776 = vmatprep.subr.mxu0 0.0
          %777 = vmatpush1.msra.mxu0 0.0
          %778 = vmatprep.subr.mxu0 0.0
          %779 = vmatpush1.msra.mxu0 0.0
          %780 = vmatprep.subr.mxu0 0.0
          %781 = vmatpush1.msra.mxu0 0.0
          %782 = vmatprep.subr.mxu0 0.0
          %783 = vmatpush1.msra.mxu0 0.0
          %784 = vmatprep.subr.mxu0 0.0
          %785 = vmatpush1.msra.mxu0 0.0
          %786 = vmatprep.subr.mxu0 0.0
          %787 = vmatpush1.msra.mxu0 0.0
          %788 = vmatprep.subr.mxu0 0.0
          %789 = vmatpush1.msra.mxu0 0.0
          %790 = vmatprep.subr.mxu0 0.0
          %791 = vmatpush1.msra.mxu0 0.0
          %792 = vmatprep.subr.mxu0 0.0
          %793 = vmatpush1.msra.mxu0 %v436
          %794 = vmatprep.subr.mxu0 0.0
          %795 = vmatpush1.msra.mxu0 %v435
          %796 = vmatprep.subr.mxu0 0.0
          %797 = vmatpush1.msra.mxu0 %v434
          %798 = vmatprep.subr.mxu0 0.0
          %799 = vmatpush1.msra.mxu0 %v433
          %800 = vmatprep.subr.mxu0 0.0
          %801 = vmatpush2.msra.mxu0 0.0
          %802 = vmatprep.subr.mxu0 0.0
          %803 = vmatpush2.msra.mxu0 0.0
          %804 = vmatprep.subr.mxu0 0.0
          %805 = vmatpush2.msra.mxu0 0.0
          %806 = vmatprep.subr.mxu0 0.0
          %807 = vmatpush2.msra.mxu0 0.0
          %808 = vmatprep.subr.mxu0 0.0
          %809 = vmatpush2.msra.mxu0 0.0
          %810 = vmatprep.subr.mxu0 0.0
          %811 = vmatpush2.msra.mxu0 0.0
          %812 = vmatprep.subr.mxu0 0.0
          %813 = vmatpush2.msra.mxu0 0.0
          %814 = vmatprep.subr.mxu0 0.0
          %815 = vmatpush2.msra.mxu0 0.0
          %816 = vmatprep.subr.mxu0 0.0
          %817 = vmatpush2.msra.mxu0 0.0
          %818 = vmatprep.subr.mxu0 0.0
          %819 = vmatpush2.msra.mxu0 0.0
          %820 = vmatprep.subr.mxu0 0.0
          %821 = vmatpush2.msra.mxu0 0.0
          %822 = vmatprep.subr.mxu0 0.0
          %823 = vmatpush2.msra.mxu0 0.0
          %824 = vmatprep.subr.mxu0 0.0
          %825 = vmatpush2.msra.mxu0 0.0
          %826 = vmatprep.subr.mxu0 0.0
          %827 = vmatpush2.msra.mxu0 0.0
          %828 = vmatprep.subr.mxu0 0.0
          %829 = vmatpush2.msra.mxu0 0.0
          %830 = vmatprep.subr.mxu0 0.0
          %831 = vmatpush2.msra.mxu0 0.0
          %832 = vmatprep.mubr.f32.mxu0 0.0
          %833 = vmatmul.mubr.f32.gmra.mxu0 %v766
          %v834 = vpop.f32.mrf.mxu0
          %v835 = vadd.f32 0.0, %v834
          %v836 = vpop.f32.mrf.mxu0
          %837 = vdwg.mxu0
          %v838 = vadd.f32 %v662, %v835
          %v839 = vxor.u32 %v838, 2147483648
          %v840 = vmul.f32 %v839, 1.442695
          %v841 = vpow.pop %v840
          %v842 = vadd.f32 %v841, 1.0
          %v843 = vrcp.pop %v842
          %v844 = vmul.f32 1.0, %v843
          %v845 = vtanh.pop %v838
          %v846 = vmul.f32 %v844, %v650
          %848 = vrot.lane.b32.xlu0 %v845, 64
          %v849 = vpop.permute.xlu0 %848
          %v851 = vmul.f32 %v844, %v849
          %853 = vrot.lane.b32.xlu0 %v851, 32
          %v854 = vpop.permute.xlu0 %853
          %v856 = vadd.f32 %v846, %v854
          %v857 = vtanh.pop %v856
          %859 = vrot.lane.b32.xlu0 %v857, 64
          %v860 = vpop.permute.xlu0 %859
          %v862 = vmul.f32 %v844, %v860
          %s863 = sadd.s32 4, %s443
          %s864 = scalar_lea.vmem [#allocation2], %s863
          %v865 = vld [vmem:[%s864] sm:$0x3]
          %s866 = sadd.s32 4, %s448
          %s867 = scalar_lea.vmem [#allocation2], %s866
          %v868 = vld [vmem:[%s867] sm:$0x3]
          %870 = vrot.lane.b32.xlu0 %v762, 32
          %v871 = vpop.permute.xlu0 %870
          %v872 = vsel %vm452, %v871, 0
          %874 = vmatprep.subr.mxu0 0.0
          %875 = vmatpush1.msra.mxu0 0.0
          %876 = vmatprep.subr.mxu0 0.0
          %877 = vmatpush1.msra.mxu0 0.0
          %878 = vmatprep.subr.mxu0 0.0
          %879 = vmatpush1.msra.mxu0 0.0
          %880 = vmatprep.subr.mxu0 0.0
          %881 = vmatpush1.msra.mxu0 0.0
          %882 = vmatprep.subr.mxu0 0.0
          %883 = vmatpush1.msra.mxu0 0.0
          %884 = vmatprep.subr.mxu0 0.0
          %885 = vmatpush1.msra.mxu0 0.0
          %886 = vmatprep.subr.mxu0 0.0
          %887 = vmatpush1.msra.mxu0 0.0
          %888 = vmatprep.subr.mxu0 0.0
          %889 = vmatpush1.msra.mxu0 0.0
          %890 = vmatprep.subr.mxu0 0.0
          %891 = vmatpush1.msra.mxu0 0.0
          %892 = vmatprep.subr.mxu0 0.0
          %893 = vmatpush1.msra.mxu0 0.0
          %894 = vmatprep.subr.mxu0 0.0
          %895 = vmatpush1.msra.mxu0 0.0
          %896 = vmatprep.subr.mxu0 0.0
          %897 = vmatpush1.msra.mxu0 0.0
          %898 = vmatprep.subr.mxu0 0.0
          %899 = vmatpush1.msra.mxu0 %v431
          %900 = vmatprep.subr.mxu0 0.0
          %901 = vmatpush1.msra.mxu0 %v430
          %902 = vmatprep.subr.mxu0 0.0
          %903 = vmatpush1.msra.mxu0 %v429
          %904 = vmatprep.subr.mxu0 0.0
          %905 = vmatpush1.msra.mxu0 %v428
          %906 = vmatprep.subr.mxu0 0.0
          %907 = vmatpush2.msra.mxu0 0.0
          %908 = vmatprep.subr.mxu0 0.0
          %909 = vmatpush2.msra.mxu0 0.0
          %910 = vmatprep.subr.mxu0 0.0
          %911 = vmatpush2.msra.mxu0 0.0
          %912 = vmatprep.subr.mxu0 0.0
          %913 = vmatpush2.msra.mxu0 0.0
          %914 = vmatprep.subr.mxu0 0.0
          %915 = vmatpush2.msra.mxu0 0.0
          %916 = vmatprep.subr.mxu0 0.0
          %917 = vmatpush2.msra.mxu0 0.0
          %918 = vmatprep.subr.mxu0 0.0
          %919 = vmatpush2.msra.mxu0 0.0
          %920 = vmatprep.subr.mxu0 0.0
          %921 = vmatpush2.msra.mxu0 0.0
          %922 = vmatprep.subr.mxu0 0.0
          %923 = vmatpush2.msra.mxu0 0.0
          %924 = vmatprep.subr.mxu0 0.0
          %925 = vmatpush2.msra.mxu0 0.0
          %926 = vmatprep.subr.mxu0 0.0
          %927 = vmatpush2.msra.mxu0 0.0
          %928 = vmatprep.subr.mxu0 0.0
          %929 = vmatpush2.msra.mxu0 0.0
          %930 = vmatprep.subr.mxu0 0.0
          %931 = vmatpush2.msra.mxu0 0.0
          %932 = vmatprep.subr.mxu0 0.0
          %933 = vmatpush2.msra.mxu0 0.0
          %934 = vmatprep.subr.mxu0 0.0
          %935 = vmatpush2.msra.mxu0 0.0
          %936 = vmatprep.subr.mxu0 0.0
          %937 = vmatpush2.msra.mxu0 0.0
          %938 = vmatprep.mubr.f32.mxu0 0.0
          %939 = vmatmul.mubr.f32.gmra.mxu0 %v872
          %v940 = vpop.f32.mrf.mxu0
          %v941 = vadd.f32 0.0, %v940
          %v942 = vpop.f32.mrf.mxu0
          %943 = vdwg.mxu0
          %v944 = vadd.f32 %v865, %v941
          %v945 = vxor.u32 %v944, 2147483648
          %v946 = vmul.f32 %v945, 1.442695
          %v947 = vpow.pop %v946
          %v948 = vadd.f32 %v947, 1.0
          %v949 = vrcp.pop %v948
          %v950 = vmul.f32 1.0, %v949
          %v951 = vtanh.pop %v944
          %v952 = vmul.f32 %v950, %v756
          %954 = vrot.lane.b32.xlu0 %v951, 64
          %v955 = vpop.permute.xlu0 %954
          %v957 = vmul.f32 %v950, %v955
          %959 = vrot.lane.b32.xlu0 %v957, 32
          %v960 = vpop.permute.xlu0 %959
          %v962 = vadd.f32 %v952, %v960
          %v963 = vtanh.pop %v962
          %965 = vrot.lane.b32.xlu0 %v963, 64
          %v966 = vpop.permute.xlu0 %965
          %v968 = vmul.f32 %v950, %v966
          %970 = vrot.lane.b32.xlu0 %v862, 32
          %v971 = vpop.permute.xlu0 %970
          %v972 = vsel %vm452, %v971, 0
          %974 = vmatprep.subr.mxu0 0.0
          %975 = vmatpush1.msra.mxu0 0.0
          %976 = vmatprep.subr.mxu0 0.0
          %977 = vmatpush1.msra.mxu0 0.0
          %978 = vmatprep.subr.mxu0 0.0
          %979 = vmatpush1.msra.mxu0 0.0
          %980 = vmatprep.subr.mxu0 0.0
          %981 = vmatpush1.msra.mxu0 0.0
          %982 = vmatprep.subr.mxu0 0.0
          %983 = vmatpush1.msra.mxu0 0.0
          %984 = vmatprep.subr.mxu0 0.0
          %985 = vmatpush1.msra.mxu0 0.0
          %986 = vmatprep.subr.mxu0 0.0
          %987 = vmatpush1.msra.mxu0 0.0
          %988 = vmatprep.subr.mxu0 0.0
          %989 = vmatpush1.msra.mxu0 0.0
          %990 = vmatprep.subr.mxu0 0.0
          %991 = vmatpush1.msra.mxu0 0.0
          %992 = vmatprep.subr.mxu0 0.0
          %993 = vmatpush1.msra.mxu0 0.0
          %994 = vmatprep.subr.mxu0 0.0
          %995 = vmatpush1.msra.mxu0 0.0
          %996 = vmatprep.subr.mxu0 0.0
          %997 = vmatpush1.msra.mxu0 0.0
          %998 = vmatprep.subr.mxu0 0.0
          %999 = vmatpush1.msra.mxu0 %v436
          %1000 = vmatprep.subr.mxu0 0.0
          %1001 = vmatpush1.msra.mxu0 %v435
          %1002 = vmatprep.subr.mxu0 0.0
          %1003 = vmatpush1.msra.mxu0 %v434
          %1004 = vmatprep.subr.mxu0 0.0
          %1005 = vmatpush1.msra.mxu0 %v433
          %1006 = vmatprep.subr.mxu0 0.0
          %1007 = vmatpush2.msra.mxu0 0.0
          %1008 = vmatprep.subr.mxu0 0.0
          %1009 = vmatpush2.msra.mxu0 0.0
          %1010 = vmatprep.subr.mxu0 0.0
          %1011 = vmatpush2.msra.mxu0 0.0
          %1012 = vmatprep.subr.mxu0 0.0
          %1013 = vmatpush2.msra.mxu0 0.0
          %1014 = vmatprep.subr.mxu0 0.0
          %1015 = vmatpush2.msra.mxu0 0.0
          %1016 = vmatprep.subr.mxu0 0.0
          %1017 = vmatpush2.msra.mxu0 0.0
          %1018 = vmatprep.subr.mxu0 0.0
          %1019 = vmatpush2.msra.mxu0 0.0
          %1020 = vmatprep.subr.mxu0 0.0
          %1021 = vmatpush2.msra.mxu0 0.0
          %1022 = vmatprep.subr.mxu0 0.0
          %1023 = vmatpush2.msra.mxu0 0.0
          %1024 = vmatprep.subr.mxu0 0.0
          %1025 = vmatpush2.msra.mxu0 0.0
          %1026 = vmatprep.subr.mxu0 0.0
          %1027 = vmatpush2.msra.mxu0 0.0
          %1028 = vmatprep.subr.mxu0 0.0
          %1029 = vmatpush2.msra.mxu0 0.0
          %1030 = vmatprep.subr.mxu0 0.0
          %1031 = vmatpush2.msra.mxu0 0.0
          %1032 = vmatprep.subr.mxu0 0.0
          %1033 = vmatpush2.msra.mxu0 0.0
          %1034 = vmatprep.subr.mxu0 0.0
          %1035 = vmatpush2.msra.mxu0 0.0
          %1036 = vmatprep.subr.mxu0 0.0
          %1037 = vmatpush2.msra.mxu0 0.0
          %1038 = vmatprep.mubr.f32.mxu0 0.0
          %1039 = vmatmul.mubr.f32.gmra.mxu0 %v972
          %v1040 = vpop.f32.mrf.mxu0
          %v1041 = vadd.f32 0.0, %v1040
          %v1042 = vpop.f32.mrf.mxu0
          %1043 = vdwg.mxu0
          %v1044 = vadd.f32 %v868, %v1041
          %v1045 = vxor.u32 %v1044, 2147483648
          %v1046 = vmul.f32 %v1045, 1.442695
          %v1047 = vpow.pop %v1046
          %v1048 = vadd.f32 %v1047, 1.0
          %v1049 = vrcp.pop %v1048
          %v1050 = vmul.f32 1.0, %v1049
          %v1051 = vtanh.pop %v1044
          %v1052 = vmul.f32 %v1050, %v856
          %1054 = vrot.lane.b32.xlu0 %v1051, 64
          %v1055 = vpop.permute.xlu0 %1054
          %v1057 = vmul.f32 %v1050, %v1055
          %1059 = vrot.lane.b32.xlu0 %v1057, 32
          %v1060 = vpop.permute.xlu0 %1059
          %v1062 = vadd.f32 %v1052, %v1060
          %v1063 = vtanh.pop %v1062
          %1065 = vrot.lane.b32.xlu0 %v1063, 64
          %v1066 = vpop.permute.xlu0 %1065
          %v1068 = vmul.f32 %v1050, %v1066
          %s1069 = sadd.s32 6, %s443
          %s1070 = scalar_lea.vmem [#allocation2], %s1069
          %v1071 = vld [vmem:[%s1070] sm:$0x3]
          %s1072 = sadd.s32 6, %s448
          %s1073 = scalar_lea.vmem [#allocation2], %s1072
          %v1074 = vld [vmem:[%s1073] sm:$0x3]
          %1076 = vrot.lane.b32.xlu0 %v968, 32
          %v1077 = vpop.permute.xlu0 %1076
          %v1078 = vsel %vm452, %v1077, 0
          %1080 = vmatprep.subr.mxu0 0.0
          %1081 = vmatpush1.msra.mxu0 0.0
          %1082 = vmatprep.subr.mxu0 0.0
          %1083 = vmatpush1.msra.mxu0 0.0
          %1084 = vmatprep.subr.mxu0 0.0
          %1085 = vmatpush1.msra.mxu0 0.0
          %1086 = vmatprep.subr.mxu0 0.0
          %1087 = vmatpush1.msra.mxu0 0.0
          %1088 = vmatprep.subr.mxu0 0.0
          %1089 = vmatpush1.msra.mxu0 0.0
          %1090 = vmatprep.subr.mxu0 0.0
          %1091 = vmatpush1.msra.mxu0 0.0
          %1092 = vmatprep.subr.mxu0 0.0
          %1093 = vmatpush1.msra.mxu0 0.0
          %1094 = vmatprep.subr.mxu0 0.0
          %1095 = vmatpush1.msra.mxu0 0.0
          %1096 = vmatprep.subr.mxu0 0.0
          %1097 = vmatpush1.msra.mxu0 0.0
          %1098 = vmatprep.subr.mxu0 0.0
          %1099 = vmatpush1.msra.mxu0 0.0
          %1100 = vmatprep.subr.mxu0 0.0
          %1101 = vmatpush1.msra.mxu0 0.0
          %1102 = vmatprep.subr.mxu0 0.0
          %1103 = vmatpush1.msra.mxu0 0.0
          %1104 = vmatprep.subr.mxu0 0.0
          %1105 = vmatpush1.msra.mxu0 %v431
          %1106 = vmatprep.subr.mxu0 0.0
          %1107 = vmatpush1.msra.mxu0 %v430
          %1108 = vmatprep.subr.mxu0 0.0
          %1109 = vmatpush1.msra.mxu0 %v429
          %1110 = vmatprep.subr.mxu0 0.0
          %1111 = vmatpush1.msra.mxu0 %v428
          %1112 = vmatprep.subr.mxu0 0.0
          %1113 = vmatpush2.msra.mxu0 0.0
          %1114 = vmatprep.subr.mxu0 0.0
          %1115 = vmatpush2.msra.mxu0 0.0
          %1116 = vmatprep.subr.mxu0 0.0
          %1117 = vmatpush2.msra.mxu0 0.0
          %1118 = vmatprep.subr.mxu0 0.0
          %1119 = vmatpush2.msra.mxu0 0.0
          %1120 = vmatprep.subr.mxu0 0.0
          %1121 = vmatpush2.msra.mxu0 0.0
          %1122 = vmatprep.subr.mxu0 0.0
          %1123 = vmatpush2.msra.mxu0 0.0
          %1124 = vmatprep.subr.mxu0 0.0
          %1125 = vmatpush2.msra.mxu0 0.0
          %1126 = vmatprep.subr.mxu0 0.0
          %1127 = vmatpush2.msra.mxu0 0.0
          %1128 = vmatprep.subr.mxu0 0.0
          %1129 = vmatpush2.msra.mxu0 0.0
          %1130 = vmatprep.subr.mxu0 0.0
          %1131 = vmatpush2.msra.mxu0 0.0
          %1132 = vmatprep.subr.mxu0 0.0
          %1133 = vmatpush2.msra.mxu0 0.0
          %1134 = vmatprep.subr.mxu0 0.0
          %1135 = vmatpush2.msra.mxu0 0.0
          %1136 = vmatprep.subr.mxu0 0.0
          %1137 = vmatpush2.msra.mxu0 0.0
          %1138 = vmatprep.subr.mxu0 0.0
          %1139 = vmatpush2.msra.mxu0 0.0
          %1140 = vmatprep.subr.mxu0 0.0
          %1141 = vmatpush2.msra.mxu0 0.0
          %1142 = vmatprep.subr.mxu0 0.0
          %1143 = vmatpush2.msra.mxu0 0.0
          %1144 = vmatprep.mubr.f32.mxu0 0.0
          %1145 = vmatmul.mubr.f32.gmra.mxu0 %v1078
          %v1146 = vpop.f32.mrf.mxu0
          %v1147 = vadd.f32 0.0, %v1146
          %v1148 = vpop.f32.mrf.mxu0
          %1149 = vdwg.mxu0
          %v1150 = vadd.f32 %v1071, %v1147
          %v1151 = vxor.u32 %v1150, 2147483648
          %v1152 = vmul.f32 %v1151, 1.442695
          %v1153 = vpow.pop %v1152
          %v1154 = vadd.f32 %v1153, 1.0
          %v1155 = vrcp.pop %v1154
          %v1156 = vmul.f32 1.0, %v1155
          %v1157 = vtanh.pop %v1150
          %v1158 = vmul.f32 %v1156, %v962
          %1160 = vrot.lane.b32.xlu0 %v1157, 64
          %v1161 = vpop.permute.xlu0 %1160
          %v1163 = vmul.f32 %v1156, %v1161
          %1165 = vrot.lane.b32.xlu0 %v1163, 32
          %v1166 = vpop.permute.xlu0 %1165
          %v1168 = vadd.f32 %v1158, %v1166
          %v1169 = vtanh.pop %v1168
          %1171 = vrot.lane.b32.xlu0 %v1169, 64
          %v1172 = vpop.permute.xlu0 %1171
          %v1174 = vmul.f32 %v1156, %v1172
          %1176 = vrot.lane.b32.xlu0 %v1068, 32
          %v1177 = vpop.permute.xlu0 %1176
          %v1178 = vsel %vm452, %v1177, 0
          %1180 = vmatprep.subr.mxu0 0.0
          %1181 = vmatpush1.msra.mxu0 0.0
          %1182 = vmatprep.subr.mxu0 0.0
          %1183 = vmatpush1.msra.mxu0 0.0
          %1184 = vmatprep.subr.mxu0 0.0
          %1185 = vmatpush1.msra.mxu0 0.0
          %1186 = vmatprep.subr.mxu0 0.0
          %1187 = vmatpush1.msra.mxu0 0.0
          %1188 = vmatprep.subr.mxu0 0.0
          %1189 = vmatpush1.msra.mxu0 0.0
          %1190 = vmatprep.subr.mxu0 0.0
          %1191 = vmatpush1.msra.mxu0 0.0
          %1192 = vmatprep.subr.mxu0 0.0
          %1193 = vmatpush1.msra.mxu0 0.0
          %1194 = vmatprep.subr.mxu0 0.0
          %1195 = vmatpush1.msra.mxu0 0.0
          %1196 = vmatprep.subr.mxu0 0.0
          %1197 = vmatpush1.msra.mxu0 0.0
          %1198 = vmatprep.subr.mxu0 0.0
          %1199 = vmatpush1.msra.mxu0 0.0
          %1200 = vmatprep.subr.mxu0 0.0
          %1201 = vmatpush1.msra.mxu0 0.0
          %1202 = vmatprep.subr.mxu0 0.0
          %1203 = vmatpush1.msra.mxu0 0.0
          %1204 = vmatprep.subr.mxu0 0.0
          %1205 = vmatpush1.msra.mxu0 %v436
          %1206 = vmatprep.subr.mxu0 0.0
          %1207 = vmatpush1.msra.mxu0 %v435
          %1208 = vmatprep.subr.mxu0 0.0
          %1209 = vmatpush1.msra.mxu0 %v434
          %1210 = vmatprep.subr.mxu0 0.0
          %1211 = vmatpush1.msra.mxu0 %v433
          %1212 = vmatprep.subr.mxu0 0.0
          %1213 = vmatpush2.msra.mxu0 0.0
          %1214 = vmatprep.subr.mxu0 0.0
          %1215 = vmatpush2.msra.mxu0 0.0
          %1216 = vmatprep.subr.mxu0 0.0
          %1217 = vmatpush2.msra.mxu0 0.0
          %1218 = vmatprep.subr.mxu0 0.0
          %1219 = vmatpush2.msra.mxu0 0.0
          %1220 = vmatprep.subr.mxu0 0.0
          %1221 = vmatpush2.msra.mxu0 0.0
          %1222 = vmatprep.subr.mxu0 0.0
          %1223 = vmatpush2.msra.mxu0 0.0
          %1224 = vmatprep.subr.mxu0 0.0
          %1225 = vmatpush2.msra.mxu0 0.0
          %1226 = vmatprep.subr.mxu0 0.0
          %1227 = vmatpush2.msra.mxu0 0.0
          %1228 = vmatprep.subr.mxu0 0.0
          %1229 = vmatpush2.msra.mxu0 0.0
          %1230 = vmatprep.subr.mxu0 0.0
          %1231 = vmatpush2.msra.mxu0 0.0
          %1232 = vmatprep.subr.mxu0 0.0
          %1233 = vmatpush2.msra.mxu0 0.0
          %1234 = vmatprep.subr.mxu0 0.0
          %1235 = vmatpush2.msra.mxu0 0.0
          %1236 = vmatprep.subr.mxu0 0.0
          %1237 = vmatpush2.msra.mxu0 0.0
          %1238 = vmatprep.subr.mxu0 0.0
          %1239 = vmatpush2.msra.mxu0 0.0
          %1240 = vmatprep.subr.mxu0 0.0
          %1241 = vmatpush2.msra.mxu0 0.0
          %1242 = vmatprep.subr.mxu0 0.0
          %1243 = vmatpush2.msra.mxu0 0.0
          %1244 = vmatprep.mubr.f32.mxu0 0.0
          %1245 = vmatmul.mubr.f32.gmra.mxu0 %v1178
          %v1246 = vpop.f32.mrf.mxu0
          %v1247 = vadd.f32 0.0, %v1246
          %v1248 = vpop.f32.mrf.mxu0
          %1249 = vdwg.mxu0
          %v1250 = vadd.f32 %v1074, %v1247
          %v1251 = vxor.u32 %v1250, 2147483648
          %v1252 = vmul.f32 %v1251, 1.442695
          %v1253 = vpow.pop %v1252
          %v1254 = vadd.f32 %v1253, 1.0
          %v1255 = vrcp.pop %v1254
          %v1256 = vmul.f32 1.0, %v1255
          %v1257 = vtanh.pop %v1250
          %v1258 = vmul.f32 %v1256, %v1062
          %1260 = vrot.lane.b32.xlu0 %v1257, 64
          %v1261 = vpop.permute.xlu0 %1260
          %v1263 = vmul.f32 %v1256, %v1261
          %1265 = vrot.lane.b32.xlu0 %v1263, 32
          %v1266 = vpop.permute.xlu0 %1265
          %v1268 = vadd.f32 %v1258, %v1266
          %v1269 = vtanh.pop %v1268
          %1271 = vrot.lane.b32.xlu0 %v1269, 64
          %v1272 = vpop.permute.xlu0 %1271
          %v1274 = vmul.f32 %v1256, %v1272
          %1276 = vrot.lane.b32.xlu0 %v1174, 32
          %v1277 = vpop.permute.xlu0 %1276
          %vm1279 = vcmask 254976
          %1280 = vst.msk [vmem:[#allocation3] sm:$0x3] %vm1279, %v1277
          %1282 = vrot.lane.b32.xlu0 %v1168, 96
          %v1283 = vpop.permute.xlu0 %1282
          %1285 = vst.msk [vmem:[#allocation4] sm:$0x3] %vm1279, %v1283
          %1287 = vrot.lane.b32.xlu0 %v1274, 32
          %v1288 = vpop.permute.xlu0 %1287
          %1290 = vst.msk [vmem:[%s439] sm:$0x3] %vm1279, %v1288
          %1292 = vrot.lane.b32.xlu0 %v1268, 96
          %v1293 = vpop.permute.xlu0 %1292
          %1295 = vst.msk [vmem:[%s441] sm:$0x3] %vm1279, %v1293
          %p1296 = scmp.eq.s32.totalorder %s20, 2
          // Predicated region
          $region61: #{tpu_custom_call.1} parent=59 // pred_check
            %p1297 = pneg %p1296
          $region62: #{tpu_custom_call.1} parent=59 // pred_check_branch
            %1299 = sbr.rel (%p1297) target = $region64
          $region63: #{tpu_custom_call.1} parent=59 // pred_region
            %1300 = vrot.lane.b32.xlu0 %v1274, 64
            %v1301 = vpop.permute.xlu0 %1300
            %v1303 = vsel %vm452, %v1277, %v1301
            %vm1304 = vcmask 517120
            %1305 = vst.msk [vmem:[#allocation11] sm:$0x3] %vm1304, %v1303
          $region64: #{tpu_custom_call.1} parent=59 // pred_fallthru
            _
        $region60: #{tpu_custom_call.1} parent=35 // pred_fallthru
          _
        // Predicated region
        $region65: #{tpu_custom_call.1} parent=35 // pred_check
          %p1306 = pneg %p126
        $region66: #{tpu_custom_call.1} parent=35 // pred_check_branch
          %1308 = sbr.rel (%p1306) target = $region68
        $region67: #{tpu_custom_call.1} parent=35 // pred_region
          %s1310 = ssub.s32 32, 32
          %1311 = vsyncadd [#allocation7], %s1310
          %s1313 = sshll.u32 [#allocation11], 4
          %s1314 = int_to_ptr.vmem [resolvable:$true] %s1313
          %1316 = dma.vmem_to_hbm [thread:$0]  %s1314, 32, %s4, [#allocation7]
        $region68: #{tpu_custom_call.1} parent=35 // pred_fallthru
          _
        // Predicated region
        $region69: #{tpu_custom_call.1} parent=35 // pred_check
          %p1317 = pneg %p126
        $region70: #{tpu_custom_call.1} parent=35 // pred_check_branch
          %1319 = sbr.rel (%p1317) target = $region72
        $region71: #{tpu_custom_call.1} parent=35 // pred_region
          %1320 = dma.done [#allocation7], 32
        $region72: #{tpu_custom_call.1} parent=35 // pred_fallthru
          _
      $region36: #{tpu_custom_call.1} parent=5 // pred_fallthru
        _
      %p1321 = scmp.le.s32.totalorder 2, %s15
      // Predicated region
      $region73: #{tpu_custom_call.1} parent=5 // pred_check
        %p1322 = pneg %p1321
      $region74: #{tpu_custom_call.1} parent=5 // pred_check_branch
        %1324 = sbr.rel (%p1322) target = $region76
      $region75: #{tpu_custom_call.1} parent=5 // pred_region
        %s1325 = ssub.s32 %s15, 2
      $region76: #{tpu_custom_call.1} parent=5 // pred_fallthru
        _
    $region6: #{tpu_custom_call.1} parent=1 // loop_footer
      %s19 = sadd.s32 1, %s15
    $region7: #{tpu_custom_call.1} parent=1 // loop_footer_branch
      %14 = sbr.rel target = $region3
    $region8: #{tpu_custom_call.1} parent=1 // loop_exit
      _
    %1326 = vsyncpa [#allocation6], 1
    %s1327 = scalar_lea.sflag [#allocation6], 1
    %1328 = vsyncpa %s1327, 1
    %1329 = vsyncpa [#allocation9], 1
    %1330 = vsyncpa [#allocation7], 1
    %s1331 = scalar_lea.sflag [#allocation7], 1
    %1332 = vsyncpa %s1331, 1

</llo_original>
